<compile_context>
chip_gen: v7x
topology: tpu7x:2x2x1
jax: 0.10.0
libtpu: 0.0.40
codegen_flags: <defaults>
</compile_context>

<pallas_src>
import functools

import jax
import jax.numpy as jnp
from jax.experimental import pallas as pl
from jax.experimental.pallas import tpu as pltpu

_MASK_VALUE = -1e30  # additive bias for masked attention scores (see header note)


def _transformer_block_kernel(
    x_ref, pad_ref,
    wq_ref, wk_ref, wv_ref, wo_ref,
    w1_ref, b1_ref, w2_ref, b2_ref,
    g1_ref, be1_ref, g2_ref, be2_ref,
    out_ref,
    *, heads, d_k,
):
    S = x_ref.shape[1]
    x = x_ref[0]                                    # (S, E) f32
    xb = x.astype(jnp.bfloat16)

    # ---- causal + pad mask bias, built once for all heads: (S, S) f32 ----
    row = jax.lax.broadcasted_iota(jnp.int32, (S, S), 0)
    col = jax.lax.broadcasted_iota(jnp.int32, (S, S), 1)
    keep = (col <= row) & (pad_ref[0] > 0.5)        # (S,S) & (1,S) -> (S,S)
    bias = jnp.where(keep, 0.0, _MASK_VALUE).astype(jnp.float32)

    # ---- QKV projections: full-width bf16 MXU matmuls, f32 accumulation ----
    q2 = jnp.dot(xb, wq_ref[...], preferred_element_type=jnp.float32)   # (S, E)
    k2 = jnp.dot(xb, wk_ref[...], preferred_element_type=jnp.float32)
    v2 = jnp.dot(xb, wv_ref[...], preferred_element_type=jnp.float32)

    # ---- head-major (H, S, d_k); attention batched over heads ----
    def split_heads(t):
        return jnp.stack(
            [t[:, h * d_k:(h + 1) * d_k] for h in range(heads)], axis=0
        ).astype(jnp.bfloat16)

    q = split_heads(q2)
    k = split_heads(k2)
    v = split_heads(v2)

    scale = float(d_k) ** -0.5
    s = jnp.einsum('hqd,hkd->hqk', q, k,
                   preferred_element_type=jnp.float32) * scale + bias   # (H,S,S) f32
    s = s - jnp.max(s, axis=-1, keepdims=True)
    p = jnp.exp(s)
    p = p * pl.reciprocal(jnp.sum(p, axis=-1, keepdims=True), approx=True)
    ctx = jnp.einsum('hqk,hkd->hqd', p.astype(jnp.bfloat16), v,
                     preferred_element_type=jnp.float32)                # (H,S,d_k) f32

    # TODO(synk): attention dropout (p=0.1) omitted -- eval-mode identity.
    heads_cat = jnp.concatenate([ctx[h] for h in range(heads)], axis=-1)  # (S, E)
    attn = jnp.dot(heads_cat.astype(jnp.bfloat16), wo_ref[...],
                   preferred_element_type=jnp.float32)

    # ---- residual + LayerNorm 1 (f32) ----
    g1 = g1_ref[...]
    be1 = be1_ref[...]
    h1 = attn + x
    mu1 = jnp.mean(h1, axis=-1, keepdims=True)
    var1 = jnp.mean((h1 - mu1) ** 2, axis=-1, keepdims=True)
    n1 = (h1 - mu1) * jax.lax.rsqrt(var1 + 1e-5) * g1 + be1

    # ---- FFN: Linear -> LeakyReLU(0.01) -> (dropout=identity) -> Linear ----
    ff = jnp.dot(n1.astype(jnp.bfloat16), w1_ref[...],
                 preferred_element_type=jnp.float32) + b1_ref[...]
    ff = jnp.where(ff > 0, ff, 0.01 * ff)
    ff = jnp.dot(ff.astype(jnp.bfloat16), w2_ref[...],
                 preferred_element_type=jnp.float32) + b2_ref[...]
    # TODO(synk): FFN dropout (p=0.1) omitted -- eval-mode identity.

    # ---- residual + LayerNorm 2 (f32) ----
    g2 = g2_ref[...]
    be2 = be2_ref[...]
    h2 = ff + n1
    mu2 = jnp.mean(h2, axis=-1, keepdims=True)
    var2 = jnp.mean((h2 - mu2) ** 2, axis=-1, keepdims=True)
    n2 = (h2 - mu2) * jax.lax.rsqrt(var2 + 1e-5) * g2 + be2

    out_ref[0] = n2.astype(out_ref.dtype)


def transformer_block(x, pad_mask, params, *, heads):
    """x: (B, S, E) float32; pad_mask: (B, S) bool; params: dict (weights as (in,out))."""
    B, S, E = x.shape
    d_k = E // heads
    d_ff = params["w1"].shape[1]

    # Pad mask passed as (B, 1, S) f32; causal mask is generated inside the kernel.
    pad_f = pad_mask.astype(jnp.float32).reshape(B, 1, S)

    bf16 = jnp.bfloat16
    wq = params["wq"].astype(bf16)
    wk = params["wk"].astype(bf16)
    wv = params["wv"].astype(bf16)
    wo = params["wo"].astype(bf16)
    w1 = params["w1"].astype(bf16)
    w2 = params["w2"].astype(bf16)

    kernel = functools.partial(_transformer_block_kernel, heads=heads, d_k=d_k)

    def const_spec(shape):
        # Grid-invariant operand: keep a single VMEM buffer (no double-buffering).
        return pl.BlockSpec(shape, lambda *_: (0,) * len(shape),
                            pipeline_mode=pl.Buffered(1))

    # Rough VMEM budget: single-buffered bf16 weights + f32 params + f32 activations
    # + double-buffered x / pad / out blocks, with 2x headroom, clamped to [32, 64] MiB.
    est = (
        2 * (4 * E * E + 2 * E * d_ff)                    # bf16 weights
        + 4 * (d_ff + 6 * E)                              # f32 bias / LN params
        + 4 * (10 * S * E + 2 * heads * S * S + 2 * S * d_ff)  # f32 activations
        + 2 * 4 * (2 * S * E + S)                         # double-buffered x/out/pad
    )
    vmem_limit = int(min(max(2 * est, 32 * 1024 * 1024), 64 * 1024 * 1024))

    # NOTE: one batch element per grid step is fine for small B/S; for large B with
    # short S, fold several batch rows into one block to amortize per-step overhead.
    return pl.pallas_call(
        kernel,
        out_shape=jax.ShapeDtypeStruct((B, S, E), jnp.float32),
        grid=(B,),
        in_specs=[
            pl.BlockSpec((1, S, E), lambda b: (b, 0, 0)),   # x
            pl.BlockSpec((1, 1, S), lambda b: (b, 0, 0)),   # pad mask row
            const_spec((E, E)),                              # wq
            const_spec((E, E)),                              # wk
            const_spec((E, E)),                              # wv
            const_spec((E, E)),                              # wo
            const_spec((E, d_ff)),                           # w1
            const_spec((1, d_ff)),                           # b1
            const_spec((d_ff, E)),                           # w2
            const_spec((1, E)),                              # b2
            const_spec((1, E)),                              # gamma1
            const_spec((1, E)),                              # beta1
            const_spec((1, E)),                              # gamma2
            const_spec((1, E)),                              # beta2
        ],
        out_specs=pl.BlockSpec((1, S, E), lambda b: (b, 0, 0)),
        compiler_params=pltpu.CompilerParams(
            dimension_semantics=("parallel",),
            vmem_limit_bytes=vmem_limit,
        ),
    )(
        x, pad_f,
        wq, wk, wv, wo,
        w1, params["b1"], w2, params["b2"],
        params["gamma1"], params["beta1"], params["gamma2"], params["beta2"],
    )


def init_params(key, embed_dim, d_ff):
    ks = jax.random.split(key, 8)
    s_e = 1.0 / jnp.sqrt(embed_dim)
    s_f = 1.0 / jnp.sqrt(d_ff)
    # Linear weights stored as (in, out)  (i.e. PyTorch weight.T).
    return {
        "wq": jax.random.uniform(ks[0], (embed_dim, embed_dim), jnp.float32, -s_e, s_e),
        "wk": jax.random.uniform(ks[1], (embed_dim, embed_dim), jnp.float32, -s_e, s_e),
        "wv": jax.random.uniform(ks[2], (embed_dim, embed_dim), jnp.float32, -s_e, s_e),
        "wo": jax.random.uniform(ks[3], (embed_dim, embed_dim), jnp.float32, -s_e, s_e),
        "w1": jax.random.uniform(ks[4], (embed_dim, d_ff), jnp.float32, -s_e, s_e),
        "b1": jax.random.uniform(ks[5], (1, d_ff), jnp.float32, -s_e, s_e),
        "w2": jax.random.uniform(ks[6], (d_ff, embed_dim), jnp.float32, -s_f, s_f),
        "b2": jax.random.uniform(ks[7], (1, embed_dim), jnp.float32, -s_f, s_f),
        # LayerNorm default init: weight=1, bias=0, eps=1e-5.
        "gamma1": jnp.ones((1, embed_dim), jnp.float32),
        "beta1": jnp.zeros((1, embed_dim), jnp.float32),
        "gamma2": jnp.ones((1, embed_dim), jnp.float32),
        "beta2": jnp.zeros((1, embed_dim), jnp.float32),
    }


if __name__ == "__main__":
    B, S, E, H, D_FF = 2, 8, 32, 4, 64

    key = jax.random.PRNGKey(0)
    k_x, k_p = jax.random.split(key)

    x = jax.random.normal(k_x, (B, S, E), dtype=jnp.float32)
    # Pad mask: batch 0 fully valid, batch 1 has last two positions padded.
    pad_mask = jnp.array(
        [[True] * S, [True] * (S - 2) + [False] * 2], dtype=jnp.bool_
    )
    params = init_params(k_p, E, D_FF)

    out = transformer_block(x, pad_mask, params, heads=H)
    out = jax.block_until_ready(out)

    assert out.shape == (B, S, E)
    assert bool(jnp.all(jnp.isfinite(out)))
    print("KERNEL_OK")
</pallas_src>

<mosaic_0001>
module attributes {stable_mosaic.version = 11 : i64} {
  func.func @_transformer_block_kernel(%arg0: i32, %arg1: memref<1x8x32xf32, #tpu.memory_space<vmem>>, %arg2: memref<1x1x8xf32, #tpu.memory_space<vmem>>, %arg3: memref<32x32xbf16, #tpu.memory_space<vmem>>, %arg4: memref<32x32xbf16, #tpu.memory_space<vmem>>, %arg5: memref<32x32xbf16, #tpu.memory_space<vmem>>, %arg6: memref<32x32xbf16, #tpu.memory_space<vmem>>, %arg7: memref<32x64xbf16, #tpu.memory_space<vmem>>, %arg8: memref<1x64xf32, #tpu.memory_space<vmem>>, %arg9: memref<64x32xbf16, #tpu.memory_space<vmem>>, %arg10: memref<1x32xf32, #tpu.memory_space<vmem>>, %arg11: memref<1x32xf32, #tpu.memory_space<vmem>>, %arg12: memref<1x32xf32, #tpu.memory_space<vmem>>, %arg13: memref<1x32xf32, #tpu.memory_space<vmem>>, %arg14: memref<1x32xf32, #tpu.memory_space<vmem>>, %arg15: memref<1x8x32xf32, #tpu.memory_space<vmem>>) attributes {dimension_semantics = [#tpu.dimension_semantics<parallel>], iteration_bounds = array<i64: 2>, scalar_prefetch = 0 : i64, scratch_operands = 0 : i64, tpu.core_type = #tpu.core_type<tc>, window_params = [{transform_indices = @transform_0, window_bounds = array<i64: 1, 8, 32>}, {transform_indices = @transform_1, window_bounds = array<i64: 1, 1, 8>}, {pipeline_mode = #tpu.pipeline_mode<synchronous>, transform_indices = @transform_2, window_bounds = array<i64: 32, 32>}, {pipeline_mode = #tpu.pipeline_mode<synchronous>, transform_indices = @transform_3, window_bounds = array<i64: 32, 32>}, {pipeline_mode = #tpu.pipeline_mode<synchronous>, transform_indices = @transform_4, window_bounds = array<i64: 32, 32>}, {pipeline_mode = #tpu.pipeline_mode<synchronous>, transform_indices = @transform_5, window_bounds = array<i64: 32, 32>}, {pipeline_mode = #tpu.pipeline_mode<synchronous>, transform_indices = @transform_6, window_bounds = array<i64: 32, 64>}, {pipeline_mode = #tpu.pipeline_mode<synchronous>, transform_indices = @transform_7, window_bounds = array<i64: 1, 64>}, {pipeline_mode = #tpu.pipeline_mode<synchronous>, transform_indices = @transform_8, window_bounds = array<i64: 64, 32>}, {pipeline_mode = #tpu.pipeline_mode<synchronous>, transform_indices = @transform_9, window_bounds = array<i64: 1, 32>}, {pipeline_mode = #tpu.pipeline_mode<synchronous>, transform_indices = @transform_10, window_bounds = array<i64: 1, 32>}, {pipeline_mode = #tpu.pipeline_mode<synchronous>, transform_indices = @transform_11, window_bounds = array<i64: 1, 32>}, {pipeline_mode = #tpu.pipeline_mode<synchronous>, transform_indices = @transform_12, window_bounds = array<i64: 1, 32>}, {pipeline_mode = #tpu.pipeline_mode<synchronous>, transform_indices = @transform_13, window_bounds = array<i64: 1, 32>}, {transform_indices = @transform_14, window_bounds = array<i64: 1, 8, 32>}]} {
    %c0 = arith.constant 0 : index
    %c0_0 = arith.constant 0 : index
    %c0_1 = arith.constant 0 : index
    %0 = vector.load %arg1[%c0, %c0_0, %c0_1] : memref<1x8x32xf32, #tpu.memory_space<vmem>>, vector<1x8x32xf32>
    %1 = vector.shape_cast %0 : vector<1x8x32xf32> to vector<8x32xf32>
    %2 = arith.truncf %1 : vector<8x32xf32> to vector<8x32xbf16>
    %3 = tpu.iota {dimensions = array<i32: 0>} : vector<8x8xi32>
    %4 = tpu.iota {dimensions = array<i32: 1>} : vector<8x8xi32>
    %5 = arith.cmpi sle, %4, %3 : vector<8x8xi32>
    %c0_2 = arith.constant 0 : index
    %c0_3 = arith.constant 0 : index
    %c0_4 = arith.constant 0 : index
    %6 = vector.load %arg2[%c0_2, %c0_3, %c0_4] : memref<1x1x8xf32, #tpu.memory_space<vmem>>, vector<1x1x8xf32>
    %7 = vector.shape_cast %6 : vector<1x1x8xf32> to vector<1x8xf32>
    %cst = arith.constant 5.000000e-01 : f32
    %8 = vector.broadcast %cst : f32 to vector<1x8xf32>
    %9 = arith.cmpf ogt, %7, %8 : vector<1x8xf32>
    %10 = vector.broadcast %9 : vector<1x8xi1> to vector<8x8xi1>
    %11 = arith.andi %5, %10 : vector<8x8xi1>
    %cst_5 = arith.constant 0.000000e+00 : f32
    %cst_6 = arith.constant -1.000000e+30 : f32
    %12 = vector.broadcast %cst_5 : f32 to vector<8x8xf32>
    %13 = vector.broadcast %cst_6 : f32 to vector<8x8xf32>
    %14 = arith.select %11, %12, %13 : vector<8x8xi1>, vector<8x8xf32>
    %c0_7 = arith.constant 0 : index
    %c0_8 = arith.constant 0 : index
    %15 = vector.load %arg3[%c0_7, %c0_8] : memref<32x32xbf16, #tpu.memory_space<vmem>>, vector<32x32xbf16>
    %cst_9 = arith.constant dense<0.000000e+00> : vector<8x32xf32>
    %16 = tpu.matmul %2, %15, %cst_9 {dimension_numbers = #tpu.dot_dimension_numbers<[1], [0], [0], [1], [0, 0, 1, 1], [], []>} : vector<8x32xbf16>, vector<32x32xbf16>, vector<8x32xf32> -> vector<8x32xf32>
    %c0_10 = arith.constant 0 : index
    %c0_11 = arith.constant 0 : index
    %17 = vector.load %arg4[%c0_10, %c0_11] : memref<32x32xbf16, #tpu.memory_space<vmem>>, vector<32x32xbf16>
    %cst_12 = arith.constant dense<0.000000e+00> : vector<8x32xf32>
    %18 = tpu.matmul %2, %17, %cst_12 {dimension_numbers = #tpu.dot_dimension_numbers<[1], [0], [0], [1], [0, 0, 1, 1], [], []>} : vector<8x32xbf16>, vector<32x32xbf16>, vector<8x32xf32> -> vector<8x32xf32>
    %c0_13 = arith.constant 0 : index
    %c0_14 = arith.constant 0 : index
    %19 = vector.load %arg5[%c0_13, %c0_14] : memref<32x32xbf16, #tpu.memory_space<vmem>>, vector<32x32xbf16>
    %cst_15 = arith.constant dense<0.000000e+00> : vector<8x32xf32>
    %20 = tpu.matmul %2, %19, %cst_15 {dimension_numbers = #tpu.dot_dimension_numbers<[1], [0], [0], [1], [0, 0, 1, 1], [], []>} : vector<8x32xbf16>, vector<32x32xbf16>, vector<8x32xf32> -> vector<8x32xf32>
    %21 = vector.extract_strided_slice %16 {offsets = [0, 0], sizes = [8, 8], strides = [1, 1]} : vector<8x32xf32> to vector<8x8xf32>
    %22 = vector.extract_strided_slice %16 {offsets = [0, 8], sizes = [8, 8], strides = [1, 1]} : vector<8x32xf32> to vector<8x8xf32>
    %23 = vector.extract_strided_slice %16 {offsets = [0, 16], sizes = [8, 8], strides = [1, 1]} : vector<8x32xf32> to vector<8x8xf32>
    %24 = vector.extract_strided_slice %16 {offsets = [0, 24], sizes = [8, 8], strides = [1, 1]} : vector<8x32xf32> to vector<8x8xf32>
    %25 = vector.shape_cast %21 : vector<8x8xf32> to vector<1x8x8xf32>
    %26 = vector.shape_cast %22 : vector<8x8xf32> to vector<1x8x8xf32>
    %27 = vector.shape_cast %23 : vector<8x8xf32> to vector<1x8x8xf32>
    %28 = vector.shape_cast %24 : vector<8x8xf32> to vector<1x8x8xf32>
    %29 = tpu.concatenate %25, %26, %27, %28 in 0 : vector<1x8x8xf32>, vector<1x8x8xf32>, vector<1x8x8xf32>, vector<1x8x8xf32> -> vector<4x8x8xf32>
    %30 = arith.truncf %29 : vector<4x8x8xf32> to vector<4x8x8xbf16>
    %31 = vector.extract_strided_slice %18 {offsets = [0, 0], sizes = [8, 8], strides = [1, 1]} : vector<8x32xf32> to vector<8x8xf32>
    %32 = vector.extract_strided_slice %18 {offsets = [0, 8], sizes = [8, 8], strides = [1, 1]} : vector<8x32xf32> to vector<8x8xf32>
    %33 = vector.extract_strided_slice %18 {offsets = [0, 16], sizes = [8, 8], strides = [1, 1]} : vector<8x32xf32> to vector<8x8xf32>
    %34 = vector.extract_strided_slice %18 {offsets = [0, 24], sizes = [8, 8], strides = [1, 1]} : vector<8x32xf32> to vector<8x8xf32>
    %35 = vector.shape_cast %31 : vector<8x8xf32> to vector<1x8x8xf32>
    %36 = vector.shape_cast %32 : vector<8x8xf32> to vector<1x8x8xf32>
    %37 = vector.shape_cast %33 : vector<8x8xf32> to vector<1x8x8xf32>
    %38 = vector.shape_cast %34 : vector<8x8xf32> to vector<1x8x8xf32>
    %39 = tpu.concatenate %35, %36, %37, %38 in 0 : vector<1x8x8xf32>, vector<1x8x8xf32>, vector<1x8x8xf32>, vector<1x8x8xf32> -> vector<4x8x8xf32>
    %40 = arith.truncf %39 : vector<4x8x8xf32> to vector<4x8x8xbf16>
    %41 = vector.extract_strided_slice %20 {offsets = [0, 0], sizes = [8, 8], strides = [1, 1]} : vector<8x32xf32> to vector<8x8xf32>
    %42 = vector.extract_strided_slice %20 {offsets = [0, 8], sizes = [8, 8], strides = [1, 1]} : vector<8x32xf32> to vector<8x8xf32>
    %43 = vector.extract_strided_slice %20 {offsets = [0, 16], sizes = [8, 8], strides = [1, 1]} : vector<8x32xf32> to vector<8x8xf32>
    %44 = vector.extract_strided_slice %20 {offsets = [0, 24], sizes = [8, 8], strides = [1, 1]} : vector<8x32xf32> to vector<8x8xf32>
    %45 = vector.shape_cast %41 : vector<8x8xf32> to vector<1x8x8xf32>
    %46 = vector.shape_cast %42 : vector<8x8xf32> to vector<1x8x8xf32>
    %47 = vector.shape_cast %43 : vector<8x8xf32> to vector<1x8x8xf32>
    %48 = vector.shape_cast %44 : vector<8x8xf32> to vector<1x8x8xf32>
    %49 = tpu.concatenate %45, %46, %47, %48 in 0 : vector<1x8x8xf32>, vector<1x8x8xf32>, vector<1x8x8xf32>, vector<1x8x8xf32> -> vector<4x8x8xf32>
    %50 = arith.truncf %49 : vector<4x8x8xf32> to vector<4x8x8xbf16>
    "tpu.trace_start"() <{level = 10 : i32, message = "hqd,hkd->hqk"}> : () -> ()
    %cst_16 = arith.constant dense<0.000000e+00> : vector<4x8x8xf32>
    %51 = tpu.matmul %30, %40, %cst_16 {dimension_numbers = #tpu.dot_dimension_numbers<[2], [2], [1], [1], [0, 0, 0, 1, 1, 1], [0], [0]>} : vector<4x8x8xbf16>, vector<4x8x8xbf16>, vector<4x8x8xf32> -> vector<4x8x8xf32>
    "tpu.trace_stop"() : () -> ()
    %cst_17 = arith.constant 0.353553385 : f32
    %52 = vector.broadcast %cst_17 : f32 to vector<4x8x8xf32>
    %53 = arith.mulf %51, %52 : vector<4x8x8xf32>
    %54 = vector.shape_cast %14 : vector<8x8xf32> to vector<1x8x8xf32>
    %55 = vector.broadcast %54 : vector<1x8x8xf32> to vector<4x8x8xf32>
    %56 = arith.addf %53, %55 : vector<4x8x8xf32>
    %cst_18 = arith.constant dense<0xFF800000> : vector<4x8xf32>
    %57 = vector.multi_reduction <maximumf>, %56, %cst_18 [2] : vector<4x8x8xf32> to vector<4x8xf32>
    %58 = vector.shape_cast %57 : vector<4x8xf32> to vector<4x8x1xf32>
    %59 = vector.broadcast %58 : vector<4x8x1xf32> to vector<4x8x8xf32>
    %60 = arith.subf %56, %59 : vector<4x8x8xf32>
    %61 = math.exp %60 : vector<4x8x8xf32>
    %cst_19 = arith.constant dense<0.000000e+00> : vector<4x8xf32>
    %62 = vector.multi_reduction <add>, %61, %cst_19 [2] : vector<4x8x8xf32> to vector<4x8xf32>
    %63 = vector.shape_cast %62 : vector<4x8xf32> to vector<4x8x1xf32>
    %64 = tpu.reciprocal %63 {approx = true} : vector<4x8x1xf32> -> vector<4x8x1xf32>
    %65 = vector.broadcast %64 : vector<4x8x1xf32> to vector<4x8x8xf32>
    %66 = arith.mulf %61, %65 : vector<4x8x8xf32>
    %67 = arith.truncf %66 : vector<4x8x8xf32> to vector<4x8x8xbf16>
    "tpu.trace_start"() <{level = 10 : i32, message = "hqk,hkd->hqd"}> : () -> ()
    %cst_20 = arith.constant dense<0.000000e+00> : vector<4x8x8xf32>
    %68 = tpu.matmul %67, %50, %cst_20 {dimension_numbers = #tpu.dot_dimension_numbers<[2], [1], [1], [2], [0, 0, 0, 1, 1, 2], [0], [0]>} : vector<4x8x8xbf16>, vector<4x8x8xbf16>, vector<4x8x8xf32> -> vector<4x8x8xf32>
    "tpu.trace_stop"() : () -> ()
    %69 = vector.extract_strided_slice %68 {offsets = [0, 0, 0], sizes = [1, 8, 8], strides = [1, 1, 1]} : vector<4x8x8xf32> to vector<1x8x8xf32>
    %70 = vector.shape_cast %69 : vector<1x8x8xf32> to vector<8x8xf32>
    %71 = vector.extract_strided_slice %68 {offsets = [1, 0, 0], sizes = [1, 8, 8], strides = [1, 1, 1]} : vector<4x8x8xf32> to vector<1x8x8xf32>
    %72 = vector.shape_cast %71 : vector<1x8x8xf32> to vector<8x8xf32>
    %73 = vector.extract_strided_slice %68 {offsets = [2, 0, 0], sizes = [1, 8, 8], strides = [1, 1, 1]} : vector<4x8x8xf32> to vector<1x8x8xf32>
    %74 = vector.shape_cast %73 : vector<1x8x8xf32> to vector<8x8xf32>
    %75 = vector.extract_strided_slice %68 {offsets = [3, 0, 0], sizes = [1, 8, 8], strides = [1, 1, 1]} : vector<4x8x8xf32> to vector<1x8x8xf32>
    %76 = vector.shape_cast %75 : vector<1x8x8xf32> to vector<8x8xf32>
    %77 = tpu.concatenate %70, %72, %74, %76 in 1 : vector<8x8xf32>, vector<8x8xf32>, vector<8x8xf32>, vector<8x8xf32> -> vector<8x32xf32>
    %78 = arith.truncf %77 : vector<8x32xf32> to vector<8x32xbf16>
    %c0_21 = arith.constant 0 : index
    %c0_22 = arith.constant 0 : index
    %79 = vector.load %arg6[%c0_21, %c0_22] : memref<32x32xbf16, #tpu.memory_space<vmem>>, vector<32x32xbf16>
    %cst_23 = arith.constant dense<0.000000e+00> : vector<8x32xf32>
    %80 = tpu.matmul %78, %79, %cst_23 {dimension_numbers = #tpu.dot_dimension_numbers<[1], [0], [0], [1], [0, 0, 1, 1], [], []>} : vector<8x32xbf16>, vector<32x32xbf16>, vector<8x32xf32> -> vector<8x32xf32>
    %c0_24 = arith.constant 0 : index
    %c0_25 = arith.constant 0 : index
    %81 = vector.load %arg11[%c0_24, %c0_25] : memref<1x32xf32, #tpu.memory_space<vmem>>, vector<1x32xf32>
    %c0_26 = arith.constant 0 : index
    %c0_27 = arith.constant 0 : index
    %82 = vector.load %arg12[%c0_26, %c0_27] : memref<1x32xf32, #tpu.memory_space<vmem>>, vector<1x32xf32>
    %83 = arith.addf %80, %1 : vector<8x32xf32>
    %cst_28 = arith.constant dense<0.000000e+00> : vector<8xf32>
    %84 = vector.multi_reduction <add>, %83, %cst_28 [1] : vector<8x32xf32> to vector<8xf32>
    %85 = vector.shape_cast %84 : vector<8xf32> to vector<8x1xf32>
    %cst_29 = arith.constant 3.200000e+01 : f32
    %86 = vector.broadcast %cst_29 : f32 to vector<8x1xf32>
    %87 = arith.divf %85, %86 : vector<8x1xf32>
    %88 = vector.broadcast %87 : vector<8x1xf32> to vector<8x32xf32>
    %89 = arith.subf %83, %88 : vector<8x32xf32>
    %90 = arith.mulf %89, %89 : vector<8x32xf32>
    %cst_30 = arith.constant dense<0.000000e+00> : vector<8xf32>
    %91 = vector.multi_reduction <add>, %90, %cst_30 [1] : vector<8x32xf32> to vector<8xf32>
    %92 = vector.shape_cast %91 : vector<8xf32> to vector<8x1xf32>
    %cst_31 = arith.constant 3.200000e+01 : f32
    %93 = vector.broadcast %cst_31 : f32 to vector<8x1xf32>
    %94 = arith.divf %92, %93 : vector<8x1xf32>
    %95 = vector.broadcast %87 : vector<8x1xf32> to vector<8x32xf32>
    %96 = arith.subf %83, %95 : vector<8x32xf32>
    %cst_32 = arith.constant 9.99999974E-6 : f32
    %97 = vector.broadcast %cst_32 : f32 to vector<8x1xf32>
    %98 = arith.addf %94, %97 : vector<8x1xf32>
    %99 = math.rsqrt %98 : vector<8x1xf32>
    %100 = vector.broadcast %99 : vector<8x1xf32> to vector<8x32xf32>
    %101 = arith.mulf %96, %100 : vector<8x32xf32>
    %102 = vector.broadcast %81 : vector<1x32xf32> to vector<8x32xf32>
    %103 = arith.mulf %101, %102 : vector<8x32xf32>
    %104 = vector.broadcast %82 : vector<1x32xf32> to vector<8x32xf32>
    %105 = arith.addf %103, %104 : vector<8x32xf32>
    %106 = arith.truncf %105 : vector<8x32xf32> to vector<8x32xbf16>
    %c0_33 = arith.constant 0 : index
    %c0_34 = arith.constant 0 : index
    %107 = vector.load %arg7[%c0_33, %c0_34] : memref<32x64xbf16, #tpu.memory_space<vmem>>, vector<32x64xbf16>
    %cst_35 = arith.constant dense<0.000000e+00> : vector<8x64xf32>
    %108 = tpu.matmul %106, %107, %cst_35 {dimension_numbers = #tpu.dot_dimension_numbers<[1], [0], [0], [1], [0, 0, 1, 1], [], []>} : vector<8x32xbf16>, vector<32x64xbf16>, vector<8x64xf32> -> vector<8x64xf32>
    %c0_36 = arith.constant 0 : index
    %c0_37 = arith.constant 0 : index
    %109 = vector.load %arg8[%c0_36, %c0_37] : memref<1x64xf32, #tpu.memory_space<vmem>>, vector<1x64xf32>
    %110 = vector.broadcast %109 : vector<1x64xf32> to vector<8x64xf32>
    %111 = arith.addf %108, %110 : vector<8x64xf32>
    %cst_38 = arith.constant 0.000000e+00 : f32
    %112 = vector.broadcast %cst_38 : f32 to vector<8x64xf32>
    %113 = arith.cmpf ogt, %111, %112 : vector<8x64xf32>
    %cst_39 = arith.constant 0.00999999977 : f32
    %114 = vector.broadcast %cst_39 : f32 to vector<8x64xf32>
    %115 = arith.mulf %114, %111 : vector<8x64xf32>
    %116 = arith.select %113, %111, %115 : vector<8x64xi1>, vector<8x64xf32>
    %117 = arith.truncf %116 : vector<8x64xf32> to vector<8x64xbf16>
    %c0_40 = arith.constant 0 : index
    %c0_41 = arith.constant 0 : index
    %118 = vector.load %arg9[%c0_40, %c0_41] : memref<64x32xbf16, #tpu.memory_space<vmem>>, vector<64x32xbf16>
    %cst_42 = arith.constant dense<0.000000e+00> : vector<8x32xf32>
    %119 = tpu.matmul %117, %118, %cst_42 {dimension_numbers = #tpu.dot_dimension_numbers<[1], [0], [0], [1], [0, 0, 1, 1], [], []>} : vector<8x64xbf16>, vector<64x32xbf16>, vector<8x32xf32> -> vector<8x32xf32>
    %c0_43 = arith.constant 0 : index
    %c0_44 = arith.constant 0 : index
    %120 = vector.load %arg10[%c0_43, %c0_44] : memref<1x32xf32, #tpu.memory_space<vmem>>, vector<1x32xf32>
    %121 = vector.broadcast %120 : vector<1x32xf32> to vector<8x32xf32>
    %122 = arith.addf %119, %121 : vector<8x32xf32>
    %c0_45 = arith.constant 0 : index
    %c0_46 = arith.constant 0 : index
    %123 = vector.load %arg13[%c0_45, %c0_46] : memref<1x32xf32, #tpu.memory_space<vmem>>, vector<1x32xf32>
    %c0_47 = arith.constant 0 : index
    %c0_48 = arith.constant 0 : index
    %124 = vector.load %arg14[%c0_47, %c0_48] : memref<1x32xf32, #tpu.memory_space<vmem>>, vector<1x32xf32>
    %125 = arith.addf %122, %105 : vector<8x32xf32>
    %cst_49 = arith.constant dense<0.000000e+00> : vector<8xf32>
    %126 = vector.multi_reduction <add>, %125, %cst_49 [1] : vector<8x32xf32> to vector<8xf32>
    %127 = vector.shape_cast %126 : vector<8xf32> to vector<8x1xf32>
    %cst_50 = arith.constant 3.200000e+01 : f32
    %128 = vector.broadcast %cst_50 : f32 to vector<8x1xf32>
    %129 = arith.divf %127, %128 : vector<8x1xf32>
    %130 = vector.broadcast %129 : vector<8x1xf32> to vector<8x32xf32>
    %131 = arith.subf %125, %130 : vector<8x32xf32>
    %132 = arith.mulf %131, %131 : vector<8x32xf32>
    %cst_51 = arith.constant dense<0.000000e+00> : vector<8xf32>
    %133 = vector.multi_reduction <add>, %132, %cst_51 [1] : vector<8x32xf32> to vector<8xf32>
    %134 = vector.shape_cast %133 : vector<8xf32> to vector<8x1xf32>
    %cst_52 = arith.constant 3.200000e+01 : f32
    %135 = vector.broadcast %cst_52 : f32 to vector<8x1xf32>
    %136 = arith.divf %134, %135 : vector<8x1xf32>
    %137 = vector.broadcast %129 : vector<8x1xf32> to vector<8x32xf32>
    %138 = arith.subf %125, %137 : vector<8x32xf32>
    %cst_53 = arith.constant 9.99999974E-6 : f32
    %139 = vector.broadcast %cst_53 : f32 to vector<8x1xf32>
    %140 = arith.addf %136, %139 : vector<8x1xf32>
    %141 = math.rsqrt %140 : vector<8x1xf32>
    %142 = vector.broadcast %141 : vector<8x1xf32> to vector<8x32xf32>
    %143 = arith.mulf %138, %142 : vector<8x32xf32>
    %144 = vector.broadcast %123 : vector<1x32xf32> to vector<8x32xf32>
    %145 = arith.mulf %143, %144 : vector<8x32xf32>
    %146 = vector.broadcast %124 : vector<1x32xf32> to vector<8x32xf32>
    %147 = arith.addf %145, %146 : vector<8x32xf32>
    %c0_54 = arith.constant 0 : index
    %c0_55 = arith.constant 0 : index
    %c0_56 = arith.constant 0 : index
    %148 = vector.load %arg15[%c0_54, %c0_55, %c0_56] : memref<1x8x32xf32, #tpu.memory_space<vmem>>, vector<1x8x32xf32>
    %149 = vector.shape_cast %148 : vector<1x8x32xf32> to vector<8x32xf32>
    %150 = vector.shape_cast %147 : vector<8x32xf32> to vector<1x8x32xf32>
    tpu.vector_store %arg15[%c0_54, %c0_55, %c0_56], %150 {strides = array<i32>} : memref<1x8x32xf32, #tpu.memory_space<vmem>>, vector<1x8x32xf32>,
    return
  }
  func.func @transform_0(%arg0: i32) -> (i32, i32, i32) {
    %c0_i32 = arith.constant 0 : i32
    %c0_i32_0 = arith.constant 0 : i32
    %c0_i32_1 = arith.constant 0 : i32
    return %arg0, %c0_i32, %c0_i32_0 : i32, i32, i32
  }
  func.func @transform_1(%arg0: i32) -> (i32, i32, i32) {
    %c0_i32 = arith.constant 0 : i32
    %c0_i32_0 = arith.constant 0 : i32
    %c0_i32_1 = arith.constant 0 : i32
    return %arg0, %c0_i32, %c0_i32_0 : i32, i32, i32
  }
  func.func @transform_2(%arg0: i32) -> (i32, i32) {
    %c0_i32 = arith.constant 0 : i32
    %c0_i32_0 = arith.constant 0 : i32
    %c0_i32_1 = arith.constant 0 : i32
    return %c0_i32, %c0_i32_0 : i32, i32
  }
  func.func @transform_3(%arg0: i32) -> (i32, i32) {
    %c0_i32 = arith.constant 0 : i32
    %c0_i32_0 = arith.constant 0 : i32
    %c0_i32_1 = arith.constant 0 : i32
    return %c0_i32, %c0_i32_0 : i32, i32
  }
  func.func @transform_4(%arg0: i32) -> (i32, i32) {
    %c0_i32 = arith.constant 0 : i32
    %c0_i32_0 = arith.constant 0 : i32
    %c0_i32_1 = arith.constant 0 : i32
    return %c0_i32, %c0_i32_0 : i32, i32
  }
  func.func @transform_5(%arg0: i32) -> (i32, i32) {
    %c0_i32 = arith.constant 0 : i32
    %c0_i32_0 = arith.constant 0 : i32
    %c0_i32_1 = arith.constant 0 : i32
    return %c0_i32, %c0_i32_0 : i32, i32
  }
  func.func @transform_6(%arg0: i32) -> (i32, i32) {
    %c0_i32 = arith.constant 0 : i32
    %c0_i32_0 = arith.constant 0 : i32
    %c0_i32_1 = arith.constant 0 : i32
    return %c0_i32, %c0_i32_0 : i32, i32
  }
  func.func @transform_7(%arg0: i32) -> (i32, i32) {
    %c0_i32 = arith.constant 0 : i32
    %c0_i32_0 = arith.constant 0 : i32
    %c0_i32_1 = arith.constant 0 : i32
    return %c0_i32, %c0_i32_0 : i32, i32
  }
  func.func @transform_8(%arg0: i32) -> (i32, i32) {
    %c0_i32 = arith.constant 0 : i32
    %c0_i32_0 = arith.constant 0 : i32
    %c0_i32_1 = arith.constant 0 : i32
    return %c0_i32, %c0_i32_0 : i32, i32
  }
  func.func @transform_9(%arg0: i32) -> (i32, i32) {
    %c0_i32 = arith.constant 0 : i32
    %c0_i32_0 = arith.constant 0 : i32
    %c0_i32_1 = arith.constant 0 : i32
    return %c0_i32, %c0_i32_0 : i32, i32
  }
  func.func @transform_10(%arg0: i32) -> (i32, i32) {
    %c0_i32 = arith.constant 0 : i32
    %c0_i32_0 = arith.constant 0 : i32
    %c0_i32_1 = arith.constant 0 : i32
    return %c0_i32, %c0_i32_0 : i32, i32
  }
  func.func @transform_11(%arg0: i32) -> (i32, i32) {
    %c0_i32 = arith.constant 0 : i32
    %c0_i32_0 = arith.constant 0 : i32
    %c0_i32_1 = arith.constant 0 : i32
    return %c0_i32, %c0_i32_0 : i32, i32
  }
  func.func @transform_12(%arg0: i32) -> (i32, i32) {
    %c0_i32 = arith.constant 0 : i32
    %c0_i32_0 = arith.constant 0 : i32
    %c0_i32_1 = arith.constant 0 : i32
    return %c0_i32, %c0_i32_0 : i32, i32
  }
  func.func @transform_13(%arg0: i32) -> (i32, i32) {
    %c0_i32 = arith.constant 0 : i32
    %c0_i32_0 = arith.constant 0 : i32
    %c0_i32_1 = arith.constant 0 : i32
    return %c0_i32, %c0_i32_0 : i32, i32
  }
  func.func @transform_14(%arg0: i32) -> (i32, i32, i32) {
    %c0_i32 = arith.constant 0 : i32
    %c0_i32_0 = arith.constant 0 : i32
    %c0_i32_1 = arith.constant 0 : i32
    return %arg0, %c0_i32, %c0_i32_0 : i32, i32, i32
  }
}

</mosaic_0001>

<llo_original>
// kernel: tpu_custom_call.1
$region0: #{tpu_custom_call.1}
  #allocation0 [shape = 'u32[]', space=smem, size = 0x4, offset = 0x4, fixed_abs, tag = 'smem constant byte address 0x4 - core index']
  #allocation1 [shape = 'u32[144,128]{1,0:T(1,128)}', space=vmem, size = 0x12000, scoped, tag = 'internal scratch']
  %s0 = inlined_call_operand.vmem [shape: f32[2,8,32], index: 0, kind: input, shape index: {}]
  %s1 = inlined_call_operand.vmem [shape: f32[2,1,8], index: 1, kind: input, shape index: {}]
  %s2 = inlined_call_operand.vmem [shape: bf16[32,32], index: 2, kind: input, shape index: {}]
  %s3 = inlined_call_operand.vmem [shape: bf16[32,32], index: 3, kind: input, shape index: {}]
  %s4 = inlined_call_operand.hbm [shape: bf16[32,32], index: 4, kind: input, shape index: {}]
  %s5 = inlined_call_operand.hbm [shape: bf16[32,32], index: 5, kind: input, shape index: {}]
  %s6 = inlined_call_operand.hbm [shape: bf16[32,64], index: 6, kind: input, shape index: {}]
  %s7 = inlined_call_operand.vmem [shape: f32[1,64], index: 7, kind: input, shape index: {}]
  %s8 = inlined_call_operand.vmem [shape: bf16[64,32], index: 8, kind: input, shape index: {}]
  %s9 = inlined_call_operand.vmem [shape: f32[1,32], index: 9, kind: input, shape index: {}]
  %s10 = inlined_call_operand.vmem [shape: f32[1,32], index: 10, kind: input, shape index: {}]
  %s11 = inlined_call_operand.vmem [shape: f32[1,32], index: 11, kind: input, shape index: {}]
  %s12 = inlined_call_operand.vmem [shape: f32[1,32], index: 12, kind: input, shape index: {}]
  %s13 = inlined_call_operand.vmem [shape: f32[1,32], index: 13, kind: input, shape index: {}]
  %s14 = inlined_call_operand.hbm [shape: f32[2,8,32], index: 14, kind: output, shape index: {}]
  %s15 = sld [smem:[#allocation0]]
  $region101: #{tpu_custom_call.1} parent=0
    _
  %s17 = ssub.s32 1, %s15
  %s18 = scalar_select 0, %s17, %s15
  $region1: #{tpu_custom_call.1} parent=0
    #allocation2 [shape = 'u8[8192]{0}', space=vmem, size = 0x2000, scoped, tag = 'input window, operand 4, single buffered']
    #allocation3 [shape = 's32[2]{0}', space=sflag, size = 0x8, scoped, tag = 'scoped memory for tpu_custom_call.1']
    #allocation4 [shape = 's32[2]{0}', space=sflag, size = 0x8, scoped, tag = 'scoped memory for tpu_custom_call.1']
    #allocation5 [shape = 'u8[8192]{0}', space=vmem, size = 0x2000, scoped, tag = 'input window, operand 5, single buffered']
    #allocation6 [shape = 's32[1]{0}', space=sflag, size = 0x4, scoped, tag = 'scoped memory for tpu_custom_call.1']
    #allocation7 [shape = 'u8[8192]{0}', space=vmem, size = 0x2000, scoped, tag = 'input window, operand 6, single buffered']
    #allocation8 [shape = 'u8[8192]{0}', space=vmem, size = 0x2000, scoped, tag = 'output window, operand 0']
    %19 = vsyncpa [#allocation3], 0
    %20 = vsyncpa [#allocation6], 0
    %21 = vsyncpa [#allocation4], 0
    %s22 = scalar_lea.sflag [#allocation4], 1
    %23 = vsyncpa %s22, 0
    loop: start=0, step=1, limit=4
    $region2: #{tpu_custom_call.1} parent=1 // loop_pre_header
      _
    $region3: #{tpu_custom_call.1} parent=1 // loop_header
      %s25 = sphi 0, %s29
      %p26 = scmp.ge.s32.totalorder %s25, 4
      %s35 = sphi 0, %s37
      %s38 = sphi 0, %s35
      %s39 = sphi 0, %s38
      %s55 = sphi 0, %s39
      %s61 = sphi 0, %s63
      %s64 = sphi 0, %s61
      %s65 = sphi 0, %s64
      %s81 = sphi 0, %s65
      %s85 = sphi 0, %s85
      %s87 = sphi 0, %s85
      %s88 = sphi 0, %s87
      %s102 = sphi 0, %s88
      %s106 = sphi 0, %s106
      %s108 = sphi 0, %s106
      %s109 = sphi 0, %s108
      %s123 = sphi 0, %s109
      %s127 = sphi 0, %s127
      %s129 = sphi 0, %s127
      %s130 = sphi 0, %s129
      %s144 = sphi 0, %s130
      %s148 = sphi 0, %s148
      %s150 = sphi 0, %s148
      %s151 = sphi 0, %s150
      %s165 = sphi 0, %s151
      %s169 = sphi 0, %s169
      %s171 = sphi 0, %s169
      %s172 = sphi 0, %s171
      %s186 = sphi 0, %s172
      %s190 = sphi 0, %s190
      %s192 = sphi 0, %s190
      %s193 = sphi 0, %s192
      %s207 = sphi 0, %s193
      %s211 = sphi 0, %s211
      %s213 = sphi 0, %s211
      %s214 = sphi 0, %s213
      %s228 = sphi 0, %s214
      %s232 = sphi 0, %s232
      %s234 = sphi 0, %s232
      %s235 = sphi 0, %s234
      %s249 = sphi 0, %s235
      %s253 = sphi 0, %s253
      %s255 = sphi 0, %s253
      %s256 = sphi 0, %s255
      %s270 = sphi 0, %s256
      %s274 = sphi 0, %s274
      %s276 = sphi 0, %s274
      %s277 = sphi 0, %s276
      %s291 = sphi 0, %s277
      %s295 = sphi 0, %s295
      %s297 = sphi 0, %s295
      %s298 = sphi 0, %s297
      %s312 = sphi 0, %s298
      %s316 = sphi 0, %s316
      %s318 = sphi 0, %s316
      %s319 = sphi 0, %s318
      %s333 = sphi 0, %s319
      %s339 = sphi 0, %s341
      %s342 = sphi 0, %s339
      %s343 = sphi 0, %s342
      %s359 = sphi 0, %s343
    $region4: #{tpu_custom_call.1} parent=1 // loop_header_branch
      %28 = sbr.rel (%p26) target = $region8
    $region5: #{tpu_custom_call.1} parent=1 // loop_body
      %s30 = ssub.s32 %s25, 1
      %s31 = ssub.s32 %s25, 2
      %s32 = sadd.s32 %s25, 1
      %s33 = ssub.s32 %s25, %s32
      %p34 = scmp.eq.s32.totalorder %s33, 0
      %s36 = sadd.s32 %s35, 1
      %s37 = scalar_select %p34, %s35, %s36
      %p40 = pneg %p34
      %p41 = scmp.eq.s32.totalorder %s25, 1
      %p42 = por %p40, %p41
      %p43 = scmp.ne.s32.totalorder %s35, %s38
      %p44 = scmp.eq.s32.totalorder %s25, 0
      %p45 = por %p43, %p44
      %p46 = scmp.ne.s32.totalorder %s35, %s38
      %p47 = scmp.eq.s32.totalorder %s30, 1
      %p48 = por %p46, %p47
      %p49 = scmp.ne.s32.totalorder %s38, %s39
      %p50 = scmp.eq.s32.totalorder %s30, 0
      %p51 = por %p49, %p50
      %p52 = scmp.ne.s32.totalorder %s38, %s39
      %p53 = scmp.eq.s32.totalorder %s31, 1
      %p54 = por %p52, %p53
      %p56 = scmp.ne.s32.totalorder %s39, %s55
      %p57 = scmp.eq.s32.totalorder %s31, 0
      %p58 = por %p56, %p57
      %s59 = ssub.s32 %s25, %s32
      %p60 = scmp.eq.s32.totalorder %s59, 0
      %s62 = sadd.s32 %s61, 1
      %s63 = scalar_select %p60, %s61, %s62
      %p66 = pneg %p60
      %p67 = scmp.eq.s32.totalorder %s25, 1
      %p68 = por %p66, %p67
      %p69 = scmp.ne.s32.totalorder %s61, %s64
      %p70 = scmp.eq.s32.totalorder %s25, 0
      %p71 = por %p69, %p70
      %p72 = scmp.ne.s32.totalorder %s61, %s64
      %p73 = scmp.eq.s32.totalorder %s30, 1
      %p74 = por %p72, %p73
      %p75 = scmp.ne.s32.totalorder %s64, %s65
      %p76 = scmp.eq.s32.totalorder %s30, 0
      %p77 = por %p75, %p76
      %p78 = scmp.ne.s32.totalorder %s64, %s65
      %p79 = scmp.eq.s32.totalorder %s31, 1
      %p80 = por %p78, %p79
      %p82 = scmp.ne.s32.totalorder %s65, %s81
      %p83 = scmp.eq.s32.totalorder %s31, 0
      %p84 = por %p82, %p83
      %s86 = sadd.s32 %s85, 1
      %p89 = scmp.eq.s32.totalorder %s25, 1
      %p90 = scmp.ne.s32.totalorder %s85, %s87
      %p91 = scmp.eq.s32.totalorder %s25, 0
      %p92 = por %p90, %p91
      %p93 = scmp.ne.s32.totalorder %s85, %s87
      %p94 = scmp.eq.s32.totalorder %s30, 1
      %p95 = por %p93, %p94
      %p96 = scmp.ne.s32.totalorder %s87, %s88
      %p97 = scmp.eq.s32.totalorder %s30, 0
      %p98 = por %p96, %p97
      %p99 = scmp.ne.s32.totalorder %s87, %s88
      %p100 = scmp.eq.s32.totalorder %s31, 1
      %p101 = por %p99, %p100
      %p103 = scmp.ne.s32.totalorder %s88, %s102
      %p104 = scmp.eq.s32.totalorder %s31, 0
      %p105 = por %p103, %p104
      %s107 = sadd.s32 %s106, 1
      %p110 = scmp.eq.s32.totalorder %s25, 1
      %p111 = scmp.ne.s32.totalorder %s106, %s108
      %p112 = scmp.eq.s32.totalorder %s25, 0
      %p113 = por %p111, %p112
      %p114 = scmp.ne.s32.totalorder %s106, %s108
      %p115 = scmp.eq.s32.totalorder %s30, 1
      %p116 = por %p114, %p115
      %p117 = scmp.ne.s32.totalorder %s108, %s109
      %p118 = scmp.eq.s32.totalorder %s30, 0
      %p119 = por %p117, %p118
      %p120 = scmp.ne.s32.totalorder %s108, %s109
      %p121 = scmp.eq.s32.totalorder %s31, 1
      %p122 = por %p120, %p121
      %p124 = scmp.ne.s32.totalorder %s109, %s123
      %p125 = scmp.eq.s32.totalorder %s31, 0
      %p126 = por %p124, %p125
      %s128 = sadd.s32 %s127, 1
      %p131 = scmp.eq.s32.totalorder %s25, 1
      %p132 = scmp.ne.s32.totalorder %s127, %s129
      %p133 = scmp.eq.s32.totalorder %s25, 0
      %p134 = por %p132, %p133
      %p135 = scmp.ne.s32.totalorder %s127, %s129
      %p136 = scmp.eq.s32.totalorder %s30, 1
      %p137 = por %p135, %p136
      %p138 = scmp.ne.s32.totalorder %s129, %s130
      %p139 = scmp.eq.s32.totalorder %s30, 0
      %p140 = por %p138, %p139
      %p141 = scmp.ne.s32.totalorder %s129, %s130
      %p142 = scmp.eq.s32.totalorder %s31, 1
      %p143 = por %p141, %p142
      %p145 = scmp.ne.s32.totalorder %s130, %s144
      %p146 = scmp.eq.s32.totalorder %s31, 0
      %p147 = por %p145, %p146
      %s149 = sadd.s32 %s148, 1
      %p152 = scmp.eq.s32.totalorder %s25, 1
      %p153 = scmp.ne.s32.totalorder %s148, %s150
      %p154 = scmp.eq.s32.totalorder %s25, 0
      %p155 = por %p153, %p154
      %p156 = scmp.ne.s32.totalorder %s148, %s150
      %p157 = scmp.eq.s32.totalorder %s30, 1
      %p158 = por %p156, %p157
      %p159 = scmp.ne.s32.totalorder %s150, %s151
      %p160 = scmp.eq.s32.totalorder %s30, 0
      %p161 = por %p159, %p160
      %p162 = scmp.ne.s32.totalorder %s150, %s151
      %p163 = scmp.eq.s32.totalorder %s31, 1
      %p164 = por %p162, %p163
      %p166 = scmp.ne.s32.totalorder %s151, %s165
      %p167 = scmp.eq.s32.totalorder %s31, 0
      %p168 = por %p166, %p167
      %s170 = sadd.s32 %s169, 1
      %p173 = scmp.eq.s32.totalorder %s25, 1
      %p174 = scmp.ne.s32.totalorder %s169, %s171
      %p175 = scmp.eq.s32.totalorder %s25, 0
      %p176 = por %p174, %p175
      %p177 = scmp.ne.s32.totalorder %s169, %s171
      %p178 = scmp.eq.s32.totalorder %s30, 1
      %p179 = por %p177, %p178
      %p180 = scmp.ne.s32.totalorder %s171, %s172
      %p181 = scmp.eq.s32.totalorder %s30, 0
      %p182 = por %p180, %p181
      %p183 = scmp.ne.s32.totalorder %s171, %s172
      %p184 = scmp.eq.s32.totalorder %s31, 1
      %p185 = por %p183, %p184
      %p187 = scmp.ne.s32.totalorder %s172, %s186
      %p188 = scmp.eq.s32.totalorder %s31, 0
      %p189 = por %p187, %p188
      %s191 = sadd.s32 %s190, 1
      %p194 = scmp.eq.s32.totalorder %s25, 1
      %p195 = scmp.ne.s32.totalorder %s190, %s192
      %p196 = scmp.eq.s32.totalorder %s25, 0
      %p197 = por %p195, %p196
      %p198 = scmp.ne.s32.totalorder %s190, %s192
      %p199 = scmp.eq.s32.totalorder %s30, 1
      %p200 = por %p198, %p199
      %p201 = scmp.ne.s32.totalorder %s192, %s193
      %p202 = scmp.eq.s32.totalorder %s30, 0
      %p203 = por %p201, %p202
      %p204 = scmp.ne.s32.totalorder %s192, %s193
      %p205 = scmp.eq.s32.totalorder %s31, 1
      %p206 = por %p204, %p205
      %p208 = scmp.ne.s32.totalorder %s193, %s207
      %p209 = scmp.eq.s32.totalorder %s31, 0
      %p210 = por %p208, %p209
      %s212 = sadd.s32 %s211, 1
      %p215 = scmp.eq.s32.totalorder %s25, 1
      %p216 = scmp.ne.s32.totalorder %s211, %s213
      %p217 = scmp.eq.s32.totalorder %s25, 0
      %p218 = por %p216, %p217
      %p219 = scmp.ne.s32.totalorder %s211, %s213
      %p220 = scmp.eq.s32.totalorder %s30, 1
      %p221 = por %p219, %p220
      %p222 = scmp.ne.s32.totalorder %s213, %s214
      %p223 = scmp.eq.s32.totalorder %s30, 0
      %p224 = por %p222, %p223
      %p225 = scmp.ne.s32.totalorder %s213, %s214
      %p226 = scmp.eq.s32.totalorder %s31, 1
      %p227 = por %p225, %p226
      %p229 = scmp.ne.s32.totalorder %s214, %s228
      %p230 = scmp.eq.s32.totalorder %s31, 0
      %p231 = por %p229, %p230
      %s233 = sadd.s32 %s232, 1
      %p236 = scmp.eq.s32.totalorder %s25, 1
      %p237 = scmp.ne.s32.totalorder %s232, %s234
      %p238 = scmp.eq.s32.totalorder %s25, 0
      %p239 = por %p237, %p238
      %p240 = scmp.ne.s32.totalorder %s232, %s234
      %p241 = scmp.eq.s32.totalorder %s30, 1
      %p242 = por %p240, %p241
      %p243 = scmp.ne.s32.totalorder %s234, %s235
      %p244 = scmp.eq.s32.totalorder %s30, 0
      %p245 = por %p243, %p244
      %p246 = scmp.ne.s32.totalorder %s234, %s235
      %p247 = scmp.eq.s32.totalorder %s31, 1
      %p248 = por %p246, %p247
      %p250 = scmp.ne.s32.totalorder %s235, %s249
      %p251 = scmp.eq.s32.totalorder %s31, 0
      %p252 = por %p250, %p251
      %s254 = sadd.s32 %s253, 1
      %p257 = scmp.eq.s32.totalorder %s25, 1
      %p258 = scmp.ne.s32.totalorder %s253, %s255
      %p259 = scmp.eq.s32.totalorder %s25, 0
      %p260 = por %p258, %p259
      %p261 = scmp.ne.s32.totalorder %s253, %s255
      %p262 = scmp.eq.s32.totalorder %s30, 1
      %p263 = por %p261, %p262
      %p264 = scmp.ne.s32.totalorder %s255, %s256
      %p265 = scmp.eq.s32.totalorder %s30, 0
      %p266 = por %p264, %p265
      %p267 = scmp.ne.s32.totalorder %s255, %s256
      %p268 = scmp.eq.s32.totalorder %s31, 1
      %p269 = por %p267, %p268
      %p271 = scmp.ne.s32.totalorder %s256, %s270
      %p272 = scmp.eq.s32.totalorder %s31, 0
      %p273 = por %p271, %p272
      %s275 = sadd.s32 %s274, 1
      %p278 = scmp.eq.s32.totalorder %s25, 1
      %p279 = scmp.ne.s32.totalorder %s274, %s276
      %p280 = scmp.eq.s32.totalorder %s25, 0
      %p281 = por %p279, %p280
      %p282 = scmp.ne.s32.totalorder %s274, %s276
      %p283 = scmp.eq.s32.totalorder %s30, 1
      %p284 = por %p282, %p283
      %p285 = scmp.ne.s32.totalorder %s276, %s277
      %p286 = scmp.eq.s32.totalorder %s30, 0
      %p287 = por %p285, %p286
      %p288 = scmp.ne.s32.totalorder %s276, %s277
      %p289 = scmp.eq.s32.totalorder %s31, 1
      %p290 = por %p288, %p289
      %p292 = scmp.ne.s32.totalorder %s277, %s291
      %p293 = scmp.eq.s32.totalorder %s31, 0
      %p294 = por %p292, %p293
      %s296 = sadd.s32 %s295, 1
      %p299 = scmp.eq.s32.totalorder %s25, 1
      %p300 = scmp.ne.s32.totalorder %s295, %s297
      %p301 = scmp.eq.s32.totalorder %s25, 0
      %p302 = por %p300, %p301
      %p303 = scmp.ne.s32.totalorder %s295, %s297
      %p304 = scmp.eq.s32.totalorder %s30, 1
      %p305 = por %p303, %p304
      %p306 = scmp.ne.s32.totalorder %s297, %s298
      %p307 = scmp.eq.s32.totalorder %s30, 0
      %p308 = por %p306, %p307
      %p309 = scmp.ne.s32.totalorder %s297, %s298
      %p310 = scmp.eq.s32.totalorder %s31, 1
      %p311 = por %p309, %p310
      %p313 = scmp.ne.s32.totalorder %s298, %s312
      %p314 = scmp.eq.s32.totalorder %s31, 0
      %p315 = por %p313, %p314
      %s317 = sadd.s32 %s316, 1
      %p320 = scmp.eq.s32.totalorder %s25, 1
      %p321 = scmp.ne.s32.totalorder %s316, %s318
      %p322 = scmp.eq.s32.totalorder %s25, 0
      %p323 = por %p321, %p322
      %p324 = scmp.ne.s32.totalorder %s316, %s318
      %p325 = scmp.eq.s32.totalorder %s30, 1
      %p326 = por %p324, %p325
      %p327 = scmp.ne.s32.totalorder %s318, %s319
      %p328 = scmp.eq.s32.totalorder %s30, 0
      %p329 = por %p327, %p328
      %p330 = scmp.ne.s32.totalorder %s318, %s319
      %p331 = scmp.eq.s32.totalorder %s31, 1
      %p332 = por %p330, %p331
      %p334 = scmp.ne.s32.totalorder %s319, %s333
      %p335 = scmp.eq.s32.totalorder %s31, 0
      %p336 = por %p334, %p335
      %s337 = ssub.s32 %s25, %s32
      %p338 = scmp.eq.s32.totalorder %s337, 0
      %s340 = sadd.s32 %s339, 1
      %s341 = scalar_select %p338, %s339, %s340
      %p344 = pneg %p338
      %p345 = scmp.eq.s32.totalorder %s25, 1
      %p346 = por %p344, %p345
      %p347 = scmp.ne.s32.totalorder %s339, %s342
      %p348 = scmp.eq.s32.totalorder %s25, 0
      %p349 = por %p347, %p348
      %p350 = scmp.ne.s32.totalorder %s339, %s342
      %p351 = scmp.eq.s32.totalorder %s30, 1
      %p352 = por %p350, %p351
      %p353 = scmp.ne.s32.totalorder %s342, %s343
      %p354 = scmp.eq.s32.totalorder %s30, 0
      %p355 = por %p353, %p354
      %p356 = scmp.ne.s32.totalorder %s342, %s343
      %p357 = scmp.eq.s32.totalorder %s31, 1
      %p358 = por %p356, %p357
      %p360 = scmp.ne.s32.totalorder %s343, %s359
      %p361 = scmp.eq.s32.totalorder %s31, 0
      %p362 = por %p360, %p361
      %p363 = scmp.le.s32.totalorder 1, %s25
      %p364 = scmp.lt.s32.totalorder %s25, 3
      %p365 = pnand %p363, %p364
      %p366 = pneg %p365
      // Predicated region
      $region9: #{tpu_custom_call.1} parent=5 // pred_check
        _
      $region10: #{tpu_custom_call.1} parent=5 // pred_check_branch
        %368 = sbr.rel (%p365) target = $region12
      $region11: #{tpu_custom_call.1} parent=5 // pred_region
        %s369 = ssub.s32 %s25, 1
        // Predicated region
        $region13: #{tpu_custom_call.1} parent=11 // pred_check
          %p370 = pneg %p98
        $region14: #{tpu_custom_call.1} parent=11 // pred_check_branch
          %372 = sbr.rel (%p370) target = $region16
        $region15: #{tpu_custom_call.1} parent=11 // pred_region
          _
        $region16: #{tpu_custom_call.1} parent=11 // pred_fallthru
          _
        // Predicated region
        $region17: #{tpu_custom_call.1} parent=11 // pred_check
          %p373 = pneg %p119
        $region18: #{tpu_custom_call.1} parent=11 // pred_check_branch
          %375 = sbr.rel (%p373) target = $region20
        $region19: #{tpu_custom_call.1} parent=11 // pred_region
          _
        $region20: #{tpu_custom_call.1} parent=11 // pred_fallthru
          _
        // Predicated region
        $region21: #{tpu_custom_call.1} parent=11 // pred_check
          %p376 = pneg %p140
        $region22: #{tpu_custom_call.1} parent=11 // pred_check_branch
          %378 = sbr.rel (%p376) target = $region24
        $region23: #{tpu_custom_call.1} parent=11 // pred_region
          %s380 = ssub.s32 256, 256
          %381 = vsyncadd [#allocation3], %s380
          %s382 = sshll.u32 [#allocation2], 4
          %s383 = int_to_ptr.vmem [resolvable:$true] %s382
          %388 = dma.hbm_to_vmem [thread:$0]  %s4, 256, %s383, [#allocation3], 64, 64, 4
        $region24: #{tpu_custom_call.1} parent=11 // pred_fallthru
          _
        // Predicated region
        $region25: #{tpu_custom_call.1} parent=11 // pred_check
          %p389 = pneg %p161
        $region26: #{tpu_custom_call.1} parent=11 // pred_check_branch
          %391 = sbr.rel (%p389) target = $region28
        $region27: #{tpu_custom_call.1} parent=11 // pred_region
          %s393 = ssub.s32 256, 256
          %394 = vsyncadd [#allocation6], %s393
          %s395 = sshll.u32 [#allocation5], 4
          %s396 = int_to_ptr.vmem [resolvable:$true] %s395
          %401 = dma.hbm_to_vmem [thread:$0]  %s5, 256, %s396, [#allocation6], 64, 64, 4
        $region28: #{tpu_custom_call.1} parent=11 // pred_fallthru
          _
        // Predicated region
        $region29: #{tpu_custom_call.1} parent=11 // pred_check
          %p402 = pneg %p182
        $region30: #{tpu_custom_call.1} parent=11 // pred_check_branch
          %404 = sbr.rel (%p402) target = $region32
        $region31: #{tpu_custom_call.1} parent=11 // pred_region
          %s406 = ssub.s32 256, 256
          %407 = vsyncadd [#allocation6], %s406
          %s408 = sshll.u32 [#allocation7], 4
          %s409 = int_to_ptr.vmem [resolvable:$true] %s408
          %414 = dma.hbm_to_vmem [thread:$0]  %s6, 256, %s409, [#allocation6], 64, 64, 4
        $region32: #{tpu_custom_call.1} parent=11 // pred_fallthru
          _
        // Predicated region
        $region33: #{tpu_custom_call.1} parent=11 // pred_check
          %p415 = pneg %p203
        $region34: #{tpu_custom_call.1} parent=11 // pred_check_branch
          %417 = sbr.rel (%p415) target = $region36
        $region35: #{tpu_custom_call.1} parent=11 // pred_region
          _
        $region36: #{tpu_custom_call.1} parent=11 // pred_fallthru
          _
        // Predicated region
        $region37: #{tpu_custom_call.1} parent=11 // pred_check
          %p418 = pneg %p224
        $region38: #{tpu_custom_call.1} parent=11 // pred_check_branch
          %420 = sbr.rel (%p418) target = $region40
        $region39: #{tpu_custom_call.1} parent=11 // pred_region
          _
        $region40: #{tpu_custom_call.1} parent=11 // pred_fallthru
          _
        // Predicated region
        $region41: #{tpu_custom_call.1} parent=11 // pred_check
          %p421 = pneg %p245
        $region42: #{tpu_custom_call.1} parent=11 // pred_check_branch
          %423 = sbr.rel (%p421) target = $region44
        $region43: #{tpu_custom_call.1} parent=11 // pred_region
          _
        $region44: #{tpu_custom_call.1} parent=11 // pred_fallthru
          _
        // Predicated region
        $region45: #{tpu_custom_call.1} parent=11 // pred_check
          %p424 = pneg %p266
        $region46: #{tpu_custom_call.1} parent=11 // pred_check_branch
          %426 = sbr.rel (%p424) target = $region48
        $region47: #{tpu_custom_call.1} parent=11 // pred_region
          _
        $region48: #{tpu_custom_call.1} parent=11 // pred_fallthru
          _
        // Predicated region
        $region49: #{tpu_custom_call.1} parent=11 // pred_check
          %p427 = pneg %p287
        $region50: #{tpu_custom_call.1} parent=11 // pred_check_branch
          %429 = sbr.rel (%p427) target = $region52
        $region51: #{tpu_custom_call.1} parent=11 // pred_region
          _
        $region52: #{tpu_custom_call.1} parent=11 // pred_fallthru
          _
        // Predicated region
        $region53: #{tpu_custom_call.1} parent=11 // pred_check
          %p430 = pneg %p308
        $region54: #{tpu_custom_call.1} parent=11 // pred_check_branch
          %432 = sbr.rel (%p430) target = $region56
        $region55: #{tpu_custom_call.1} parent=11 // pred_region
          _
        $region56: #{tpu_custom_call.1} parent=11 // pred_fallthru
          _
        // Predicated region
        $region57: #{tpu_custom_call.1} parent=11 // pred_check
          %p433 = pneg %p329
        $region58: #{tpu_custom_call.1} parent=11 // pred_check_branch
          %435 = sbr.rel (%p433) target = $region60
        $region59: #{tpu_custom_call.1} parent=11 // pred_region
          _
        $region60: #{tpu_custom_call.1} parent=11 // pred_fallthru
          _
      $region12: #{tpu_custom_call.1} parent=5 // pred_fallthru
        _
      %p436 = scmp.lt.s32.totalorder %s25, 2
      // Predicated region
      $region61: #{tpu_custom_call.1} parent=5 // pred_check
        %p437 = pneg %p436
      $region62: #{tpu_custom_call.1} parent=5 // pred_check_branch
        %439 = sbr.rel (%p437) target = $region64
      $region63: #{tpu_custom_call.1} parent=5 // pred_region
        // Predicated region
        $region65: #{tpu_custom_call.1} parent=63 // pred_check
          %p440 = pneg %p45
        $region66: #{tpu_custom_call.1} parent=63 // pred_check_branch
          %442 = sbr.rel (%p440) target = $region68
        $region67: #{tpu_custom_call.1} parent=63 // pred_region
          %p443 = scmp.lt.s32.totalorder %s25, 1
          %s444 = scalar_select %p443, %s25, 1
          %s445 = smul.addr %s444, 8
          %s446 = scalar_lea.vmem %s0, %s445
        $region68: #{tpu_custom_call.1} parent=63 // pred_fallthru
          _
        // Predicated region
        $region69: #{tpu_custom_call.1} parent=63 // pred_check
          %p447 = pneg %p71
        $region70: #{tpu_custom_call.1} parent=63 // pred_check_branch
          %449 = sbr.rel (%p447) target = $region72
        $region71: #{tpu_custom_call.1} parent=63 // pred_region
          %p450 = scmp.lt.s32.totalorder %s25, 1
          %s451 = scalar_select %p450, %s25, 1
          %s452 = scalar_lea.vmem %s1, %s451
        $region72: #{tpu_custom_call.1} parent=63 // pred_fallthru
          _
      $region64: #{tpu_custom_call.1} parent=5 // pred_fallthru
        _
      %p453 = scmp.le.s32.totalorder 1, %s25
      %p454 = scmp.lt.s32.totalorder %s25, 3
      %p455 = pnand %p453, %p454
      %p456 = pneg %p455
      // Predicated region
      $region73: #{tpu_custom_call.1} parent=5 // pred_check
        _
      $region74: #{tpu_custom_call.1} parent=5 // pred_check_branch
        %458 = sbr.rel (%p455) target = $region76
      $region75: #{tpu_custom_call.1} parent=5 // pred_region
        %s459 = ssub.s32 %s25, 1
        // Predicated region
        $region77: #{tpu_custom_call.1} parent=75 // pred_check
          %p460 = pneg %p140
        $region78: #{tpu_custom_call.1} parent=75 // pred_check_branch
          %462 = sbr.rel (%p460) target = $region80
        $region79: #{tpu_custom_call.1} parent=75 // pred_region
          %463 = dma.done [#allocation3], 256
        $region80: #{tpu_custom_call.1} parent=75 // pred_fallthru
          _
        // Predicated region
        $region81: #{tpu_custom_call.1} parent=75 // pred_check
          %p464 = pneg %p161
        $region82: #{tpu_custom_call.1} parent=75 // pred_check_branch
          %466 = sbr.rel (%p464) target = $region84
        $region83: #{tpu_custom_call.1} parent=75 // pred_region
          %467 = dma.done [#allocation6], 256
        $region84: #{tpu_custom_call.1} parent=75 // pred_fallthru
          _
        // Predicated region
        $region85: #{tpu_custom_call.1} parent=75 // pred_check
          %p468 = pneg %p182
        $region86: #{tpu_custom_call.1} parent=75 // pred_check_branch
          %470 = sbr.rel (%p468) target = $region88
        $region87: #{tpu_custom_call.1} parent=75 // pred_region
          %471 = dma.done [#allocation6], 256
        $region88: #{tpu_custom_call.1} parent=75 // pred_fallthru
          _
        %p472 = scmp.lt.s32.totalorder %s30, 1
        %s473 = scalar_select %p472, %s30, 1
        %s474 = smul.addr %s473, 8
        %s475 = scalar_lea.vmem %s0, %s474
        %p476 = pneg %p51
        %p477 = pneg %p48
        %p478 = scmp.lt.s32.totalorder %s30, 1
        %s479 = scalar_select %p478, %s30, 1
        %s480 = scalar_lea.vmem %s1, %s479
        %p481 = pneg %p77
        %p482 = pneg %p74
        %p483 = pneg %p98
        %p484 = pneg %p95
        %p485 = pneg %p119
        %p486 = pneg %p116
        %p487 = pneg %p140
        %p488 = pneg %p137
        %p489 = pneg %p161
        %p490 = pneg %p158
        %p491 = pneg %p182
        %p492 = pneg %p179
        %p493 = pneg %p203
        %p494 = pneg %p200
        %p495 = pneg %p224
        %p496 = pneg %p221
        %p497 = pneg %p245
        %p498 = pneg %p242
        %p499 = pneg %p266
        %p500 = pneg %p263
        %p501 = pneg %p287
        %p502 = pneg %p284
        %p503 = pneg %p308
        %p504 = pneg %p305
        %p505 = pneg %p329
        %p506 = pneg %p326
        %p507 = pneg %p355
        %p508 = pneg %p352
        %s509 = sand.u32 %s342, 1
        %s510 = scalar_lea.sflag [#allocation4], %s509
        %s511 = sand.u32 %s342, 1
        %s512 = smul.addr %s511, 8
        %s513 = scalar_lea.vmem [#allocation8], %s512
        %p514 = scmp.lt.s32.totalorder %s30, 1
        %s515 = scalar_select %p514, %s30, 1
        %s516 = smul.addr %s515, 8
        %s517 = scalar_lea.vmem %s0, %s516
        %p518 = scmp.lt.s32.totalorder %s30, 1
        %s519 = scalar_select %p518, %s30, 1
        %s520 = scalar_lea.vmem %s1, %s519
        %v522 = vld [vmem:[%s517] sm:$0xff]
        %v523 = vpack.c.bf16 %v522, %v522
        %v524 = vlaneseq
        %v525 = vshrl.u32 %v524, 7
        %v526 = vlaneseq
        %v527 = vand.u32 %v526, 127
        %vm528 = vcmp.le.s32.totalorder %v527, %v525
        %v529 = vld [vmem:[%s520] sm:$0x1]
        %vm530 = vcmp.gt.f32.partialorder %v529, 0.5
        %v531 = vsel %vm530, 1, 0
        %v532 = vlaneseq
        %v533 = vshrl.u32 %v532, 7
        %v534 = vsub.s32 0, %v533
        %v535 = vrot.slane %v531, %v534
        %vm536 = vcmp.eq.s32.totalorder %v535, 1
        %vm537 = vmand %vm528, %vm536
        %v538 = vsel %vm537, 0.0, -1e+30
        %v539 = vld [vmem:[%s2] sm:$0xf]
        %v540 = vld [vmem:[%s2 + $0x4] sm:$0xf]
        %v541 = vld [vmem:[%s2 + $0x8] sm:$0xf]
        %v542 = vld [vmem:[%s2 + $0xc] sm:$0xf]
        %v547 = vunpack.c.l.b16 %v539
        %v548 = vunpack.c.l.b16 %v540
        %v549 = vunpack.c.l.b16 %v541
        %v550 = vunpack.c.l.b16 %v542
        %v551 = vpack.c.b16 %v548, %v547
        %v552 = vpack.c.b16 %v550, %v549
        %vm555 = vcmask 261120
        %v557 = vsel %vm555, %v523, 0
        %559 = vmatprep.subr.bf16.mxu0 0
        %560 = vmatpush1.bf16.msra.mxu0 %v551
        %561 = vmatprep.subr.bf16.mxu0 0
        %562 = vmatpush1.bf16.msra.mxu0 %v552
        %563 = vmatprep.subr.bf16.mxu0 0
        %564 = vmatpush1.bf16.msra.mxu0 0
        %565 = vmatprep.subr.bf16.mxu0 0
        %566 = vmatpush1.bf16.msra.mxu0 0
        %567 = vmatprep.subr.bf16.mxu0 0
        %568 = vmatpush1.bf16.msra.mxu0 0
        %569 = vmatprep.subr.bf16.mxu0 0
        %570 = vmatpush1.bf16.msra.mxu0 0
        %571 = vmatprep.subr.bf16.mxu0 0
        %572 = vmatpush1.bf16.msra.mxu0 0
        %573 = vmatprep.subr.bf16.mxu0 0
        %574 = vmatpush1.bf16.msra.mxu0 0
        %575 = vmatprep.subr.bf16.mxu0 0
        %576 = vmatpush1.bf16.msra.mxu0 0
        %577 = vmatprep.subr.bf16.mxu0 0
        %578 = vmatpush1.bf16.msra.mxu0 0
        %579 = vmatprep.subr.bf16.mxu0 0
        %580 = vmatpush1.bf16.msra.mxu0 0
        %581 = vmatprep.subr.bf16.mxu0 0
        %582 = vmatpush1.bf16.msra.mxu0 0
        %583 = vmatprep.subr.bf16.mxu0 0
        %584 = vmatpush1.bf16.msra.mxu0 0
        %585 = vmatprep.subr.bf16.mxu0 0
        %586 = vmatpush1.bf16.msra.mxu0 0
        %587 = vmatprep.subr.bf16.mxu0 0
        %588 = vmatpush1.bf16.msra.mxu0 0
        %589 = vmatprep.subr.bf16.mxu0 0
        %590 = vmatpush1.bf16.msra.mxu0 0
        %591 = vmatprep.mubr.bf16.mxu0 0
        %592 = vmatmul.mubr.bf16.gmra.mrb[0].mxu0 %v557
        %v593 = vpop.f32.mrb[0].mxu0
        %v594 = vadd.f32 0.0, %v593
        %v595 = vpop.f32.mrb[0].mxu0
        %v596 = vpop.f32.mrb[0].mxu0
        %v597 = vpop.f32.mrb[0].mxu0
        %598 = vdwg.mxu0
        %v599 = vld [vmem:[%s3] sm:$0xf]
        %v600 = vld [vmem:[%s3 + $0x4] sm:$0xf]
        %v601 = vld [vmem:[%s3 + $0x8] sm:$0xf]
        %v602 = vld [vmem:[%s3 + $0xc] sm:$0xf]
        %v607 = vunpack.c.l.b16 %v599
        %v608 = vunpack.c.l.b16 %v600
        %v609 = vunpack.c.l.b16 %v601
        %v610 = vunpack.c.l.b16 %v602
        %v611 = vpack.c.b16 %v608, %v607
        %v612 = vpack.c.b16 %v610, %v609
        %615 = vmatprep.subr.bf16.mxu0 0
        %616 = vmatpush1.bf16.msra.mxu0 %v611
        %617 = vmatprep.subr.bf16.mxu0 0
        %618 = vmatpush1.bf16.msra.mxu0 %v612
        %619 = vmatprep.subr.bf16.mxu0 0
        %620 = vmatpush1.bf16.msra.mxu0 0
        %621 = vmatprep.subr.bf16.mxu0 0
        %622 = vmatpush1.bf16.msra.mxu0 0
        %623 = vmatprep.subr.bf16.mxu0 0
        %624 = vmatpush1.bf16.msra.mxu0 0
        %625 = vmatprep.subr.bf16.mxu0 0
        %626 = vmatpush1.bf16.msra.mxu0 0
        %627 = vmatprep.subr.bf16.mxu0 0
        %628 = vmatpush1.bf16.msra.mxu0 0
        %629 = vmatprep.subr.bf16.mxu0 0
        %630 = vmatpush1.bf16.msra.mxu0 0
        %631 = vmatprep.subr.bf16.mxu0 0
        %632 = vmatpush1.bf16.msra.mxu0 0
        %633 = vmatprep.subr.bf16.mxu0 0
        %634 = vmatpush1.bf16.msra.mxu0 0
        %635 = vmatprep.subr.bf16.mxu0 0
        %636 = vmatpush1.bf16.msra.mxu0 0
        %637 = vmatprep.subr.bf16.mxu0 0
        %638 = vmatpush1.bf16.msra.mxu0 0
        %639 = vmatprep.subr.bf16.mxu0 0
        %640 = vmatpush1.bf16.msra.mxu0 0
        %641 = vmatprep.subr.bf16.mxu0 0
        %642 = vmatpush1.bf16.msra.mxu0 0
        %643 = vmatprep.subr.bf16.mxu0 0
        %644 = vmatpush1.bf16.msra.mxu0 0
        %645 = vmatprep.subr.bf16.mxu0 0
        %646 = vmatpush1.bf16.msra.mxu0 0
        %647 = vmatprep.mubr.bf16.mxu0 0
        %648 = vmatmul.mubr.bf16.gmra.mrb[0].mxu0 %v557
        %v649 = vpop.f32.mrb[0].mxu0
        %v650 = vadd.f32 0.0, %v649
        %v651 = vpop.f32.mrb[0].mxu0
        %v652 = vpop.f32.mrb[0].mxu0
        %v653 = vpop.f32.mrb[0].mxu0
        %654 = vdwg.mxu0
        %v655 = vld [vmem:[#allocation2] sm:$0xf]
        %v656 = vld [vmem:[#allocation2 + $0x4] sm:$0xf]
        %v657 = vld [vmem:[#allocation2 + $0x8] sm:$0xf]
        %v658 = vld [vmem:[#allocation2 + $0xc] sm:$0xf]
        %v663 = vunpack.c.l.b16 %v655
        %v664 = vunpack.c.l.b16 %v656
        %v665 = vunpack.c.l.b16 %v657
        %v666 = vunpack.c.l.b16 %v658
        %v667 = vpack.c.b16 %v664, %v663
        %v668 = vpack.c.b16 %v666, %v665
        %671 = vmatprep.subr.bf16.mxu0 0
        %672 = vmatpush1.bf16.msra.mxu0 %v667
        %673 = vmatprep.subr.bf16.mxu0 0
        %674 = vmatpush1.bf16.msra.mxu0 %v668
        %675 = vmatprep.subr.bf16.mxu0 0
        %676 = vmatpush1.bf16.msra.mxu0 0
        %677 = vmatprep.subr.bf16.mxu0 0
        %678 = vmatpush1.bf16.msra.mxu0 0
        %679 = vmatprep.subr.bf16.mxu0 0
        %680 = vmatpush1.bf16.msra.mxu0 0
        %681 = vmatprep.subr.bf16.mxu0 0
        %682 = vmatpush1.bf16.msra.mxu0 0
        %683 = vmatprep.subr.bf16.mxu0 0
        %684 = vmatpush1.bf16.msra.mxu0 0
        %685 = vmatprep.subr.bf16.mxu0 0
        %686 = vmatpush1.bf16.msra.mxu0 0
        %687 = vmatprep.subr.bf16.mxu0 0
        %688 = vmatpush1.bf16.msra.mxu0 0
        %689 = vmatprep.subr.bf16.mxu0 0
        %690 = vmatpush1.bf16.msra.mxu0 0
        %691 = vmatprep.subr.bf16.mxu0 0
        %692 = vmatpush1.bf16.msra.mxu0 0
        %693 = vmatprep.subr.bf16.mxu0 0
        %694 = vmatpush1.bf16.msra.mxu0 0
        %695 = vmatprep.subr.bf16.mxu0 0
        %696 = vmatpush1.bf16.msra.mxu0 0
        %697 = vmatprep.subr.bf16.mxu0 0
        %698 = vmatpush1.bf16.msra.mxu0 0
        %699 = vmatprep.subr.bf16.mxu0 0
        %700 = vmatpush1.bf16.msra.mxu0 0
        %701 = vmatprep.subr.bf16.mxu0 0
        %702 = vmatpush1.bf16.msra.mxu0 0
        %703 = vmatprep.mubr.bf16.mxu0 0
        %704 = vmatmul.mubr.bf16.gmra.mrb[0].mxu0 %v557
        %v705 = vpop.f32.mrb[0].mxu0
        %v706 = vadd.f32 0.0, %v705
        %v707 = vpop.f32.mrb[0].mxu0
        %v708 = vpop.f32.mrb[0].mxu0
        %v709 = vpop.f32.mrb[0].mxu0
        %710 = vdwg.mxu0
        %712 = vrot.lane.b32.xlu0 %v594, 120
        %v713 = vpop.permute.xlu0 %712
        %715 = vrot.lane.b32.xlu0 %v594, 112
        %v716 = vpop.permute.xlu0 %715
        %718 = vrot.lane.b32.xlu0 %v594, 104
        %v719 = vpop.permute.xlu0 %718
        %v721 = vpack.c.bf16 %v594, %v594
        %v722 = vpack.c.bf16 %v713, %v713
        %v723 = vpack.c.bf16 %v716, %v716
        %v724 = vpack.c.bf16 %v719, %v719
        %726 = vrot.lane.b32.xlu0 %v650, 120
        %v727 = vpop.permute.xlu0 %726
        %729 = vrot.lane.b32.xlu0 %v650, 112
        %v730 = vpop.permute.xlu0 %729
        %732 = vrot.lane.b32.xlu0 %v650, 104
        %v733 = vpop.permute.xlu0 %732
        %v735 = vpack.c.bf16 %v650, %v650
        %v736 = vpack.c.bf16 %v727, %v727
        %v737 = vpack.c.bf16 %v730, %v730
        %v738 = vpack.c.bf16 %v733, %v733
        %740 = vrot.lane.b32.xlu0 %v706, 120
        %v741 = vpop.permute.xlu0 %740
        %743 = vrot.lane.b32.xlu0 %v706, 112
        %v744 = vpop.permute.xlu0 %743
        %746 = vrot.lane.b32.xlu0 %v706, 104
        %v747 = vpop.permute.xlu0 %746
        %v749 = vpack.c.bf16 %v706, %v706
        %v750 = vpack.c.bf16 %v741, %v741
        %v751 = vpack.c.bf16 %v744, %v744
        %v752 = vpack.c.bf16 %v747, %v747
        %vm753 = vcmask 64512
        %v755 = vsel %vm753, %v721, 0
        %v758 = vsel %vm753, %v735, 0
        %760 = vmatprep.subr.bf16.mxu0 0
        %761 = vmatpush1.bf16.xpose.msra.mxu0 %v758
        %762 = vmatprep.subr.bf16.mxu0 0
        %763 = vmatpush1.bf16.xpose.msra.mxu0 0
        %764 = vmatprep.subr.bf16.mxu0 0
        %765 = vmatpush1.bf16.xpose.msra.mxu0 0
        %766 = vmatprep.subr.bf16.mxu0 0
        %767 = vmatpush1.bf16.xpose.msra.mxu0 0
        %768 = vmatprep.subr.bf16.mxu0 0
        %769 = vmatpush1.bf16.xpose.msra.mxu0 0
        %770 = vmatprep.subr.bf16.mxu0 0
        %771 = vmatpush1.bf16.xpose.msra.mxu0 0
        %772 = vmatprep.subr.bf16.mxu0 0
        %773 = vmatpush1.bf16.xpose.msra.mxu0 0
        %774 = vmatprep.subr.bf16.mxu0 0
        %775 = vmatpush1.bf16.xpose.msra.mxu0 0
        %776 = vmatprep.subr.bf16.mxu0 0
        %777 = vmatpush1.bf16.xpose.msra.mxu0 0
        %778 = vmatprep.subr.bf16.mxu0 0
        %779 = vmatpush1.bf16.xpose.msra.mxu0 0
        %780 = vmatprep.subr.bf16.mxu0 0
        %781 = vmatpush1.bf16.xpose.msra.mxu0 0
        %782 = vmatprep.subr.bf16.mxu0 0
        %783 = vmatpush1.bf16.xpose.msra.mxu0 0
        %784 = vmatprep.subr.bf16.mxu0 0
        %785 = vmatpush1.bf16.xpose.msra.mxu0 0
        %786 = vmatprep.subr.bf16.mxu0 0
        %787 = vmatpush1.bf16.xpose.msra.mxu0 0
        %788 = vmatprep.subr.bf16.mxu0 0
        %789 = vmatpush1.bf16.xpose.msra.mxu0 0
        %790 = vmatprep.subr.bf16.mxu0 0
        %791 = vmatpush1.bf16.xpose.msra.mxu0 0
        %792 = vmatprep.mubr.bf16.mxu0 0
        %793 = vmatmul.mubr.bf16.gmra.mrb[0].mxu0 %v755
        %v794 = vpop.f32.mrb[0].mxu0
        %v795 = vadd.f32 0.0, %v794
        %v796 = vpop.f32.mrb[0].mxu0
        %v797 = vpop.f32.mrb[0].mxu0
        %v798 = vpop.f32.mrb[0].mxu0
        %799 = vdwg.mxu0
        %v801 = vsel %vm753, %v722, 0
        %v804 = vsel %vm753, %v736, 0
        %806 = vmatprep.subr.bf16.mxu0 0
        %807 = vmatpush1.bf16.xpose.msra.mxu0 %v804
        %808 = vmatprep.subr.bf16.mxu0 0
        %809 = vmatpush1.bf16.xpose.msra.mxu0 0
        %810 = vmatprep.subr.bf16.mxu0 0
        %811 = vmatpush1.bf16.xpose.msra.mxu0 0
        %812 = vmatprep.subr.bf16.mxu0 0
        %813 = vmatpush1.bf16.xpose.msra.mxu0 0
        %814 = vmatprep.subr.bf16.mxu0 0
        %815 = vmatpush1.bf16.xpose.msra.mxu0 0
        %816 = vmatprep.subr.bf16.mxu0 0
        %817 = vmatpush1.bf16.xpose.msra.mxu0 0
        %818 = vmatprep.subr.bf16.mxu0 0
        %819 = vmatpush1.bf16.xpose.msra.mxu0 0
        %820 = vmatprep.subr.bf16.mxu0 0
        %821 = vmatpush1.bf16.xpose.msra.mxu0 0
        %822 = vmatprep.subr.bf16.mxu0 0
        %823 = vmatpush1.bf16.xpose.msra.mxu0 0
        %824 = vmatprep.subr.bf16.mxu0 0
        %825 = vmatpush1.bf16.xpose.msra.mxu0 0
        %826 = vmatprep.subr.bf16.mxu0 0
        %827 = vmatpush1.bf16.xpose.msra.mxu0 0
        %828 = vmatprep.subr.bf16.mxu0 0
        %829 = vmatpush1.bf16.xpose.msra.mxu0 0
        %830 = vmatprep.subr.bf16.mxu0 0
        %831 = vmatpush1.bf16.xpose.msra.mxu0 0
        %832 = vmatprep.subr.bf16.mxu0 0
        %833 = vmatpush1.bf16.xpose.msra.mxu0 0
        %834 = vmatprep.subr.bf16.mxu0 0
        %835 = vmatpush1.bf16.xpose.msra.mxu0 0
        %836 = vmatprep.subr.bf16.mxu0 0
        %837 = vmatpush1.bf16.xpose.msra.mxu0 0
        %838 = vmatprep.mubr.bf16.mxu0 0
        %839 = vmatmul.mubr.bf16.gmra.mrb[0].mxu0 %v801
        %v840 = vpop.f32.mrb[0].mxu0
        %v841 = vadd.f32 0.0, %v840
        %v842 = vpop.f32.mrb[0].mxu0
        %v843 = vpop.f32.mrb[0].mxu0
        %v844 = vpop.f32.mrb[0].mxu0
        %845 = vdwg.mxu0
        %v847 = vsel %vm753, %v723, 0
        %v850 = vsel %vm753, %v737, 0
        %852 = vmatprep.subr.bf16.mxu0 0
        %853 = vmatpush1.bf16.xpose.msra.mxu0 %v850
        %854 = vmatprep.subr.bf16.mxu0 0
        %855 = vmatpush1.bf16.xpose.msra.mxu0 0
        %856 = vmatprep.subr.bf16.mxu0 0
        %857 = vmatpush1.bf16.xpose.msra.mxu0 0
        %858 = vmatprep.subr.bf16.mxu0 0
        %859 = vmatpush1.bf16.xpose.msra.mxu0 0
        %860 = vmatprep.subr.bf16.mxu0 0
        %861 = vmatpush1.bf16.xpose.msra.mxu0 0
        %862 = vmatprep.subr.bf16.mxu0 0
        %863 = vmatpush1.bf16.xpose.msra.mxu0 0
        %864 = vmatprep.subr.bf16.mxu0 0
        %865 = vmatpush1.bf16.xpose.msra.mxu0 0
        %866 = vmatprep.subr.bf16.mxu0 0
        %867 = vmatpush1.bf16.xpose.msra.mxu0 0
        %868 = vmatprep.subr.bf16.mxu0 0
        %869 = vmatpush1.bf16.xpose.msra.mxu0 0
        %870 = vmatprep.subr.bf16.mxu0 0
        %871 = vmatpush1.bf16.xpose.msra.mxu0 0
        %872 = vmatprep.subr.bf16.mxu0 0
        %873 = vmatpush1.bf16.xpose.msra.mxu0 0
        %874 = vmatprep.subr.bf16.mxu0 0
        %875 = vmatpush1.bf16.xpose.msra.mxu0 0
        %876 = vmatprep.subr.bf16.mxu0 0
        %877 = vmatpush1.bf16.xpose.msra.mxu0 0
        %878 = vmatprep.subr.bf16.mxu0 0
        %879 = vmatpush1.bf16.xpose.msra.mxu0 0
        %880 = vmatprep.subr.bf16.mxu0 0
        %881 = vmatpush1.bf16.xpose.msra.mxu0 0
        %882 = vmatprep.subr.bf16.mxu0 0
        %883 = vmatpush1.bf16.xpose.msra.mxu0 0
        %884 = vmatprep.mubr.bf16.mxu0 0
        %885 = vmatmul.mubr.bf16.gmra.mrb[0].mxu0 %v847
        %v886 = vpop.f32.mrb[0].mxu0
        %v887 = vadd.f32 0.0, %v886
        %v888 = vpop.f32.mrb[0].mxu0
        %v889 = vpop.f32.mrb[0].mxu0
        %v890 = vpop.f32.mrb[0].mxu0
        %891 = vdwg.mxu0
        %v893 = vsel %vm753, %v724, 0
        %v896 = vsel %vm753, %v738, 0
        %898 = vmatprep.subr.bf16.mxu0 0
        %899 = vmatpush1.bf16.xpose.msra.mxu0 %v896
        %900 = vmatprep.subr.bf16.mxu0 0
        %901 = vmatpush1.bf16.xpose.msra.mxu0 0
        %902 = vmatprep.subr.bf16.mxu0 0
        %903 = vmatpush1.bf16.xpose.msra.mxu0 0
        %904 = vmatprep.subr.bf16.mxu0 0
        %905 = vmatpush1.bf16.xpose.msra.mxu0 0
        %906 = vmatprep.subr.bf16.mxu0 0
        %907 = vmatpush1.bf16.xpose.msra.mxu0 0
        %908 = vmatprep.subr.bf16.mxu0 0
        %909 = vmatpush1.bf16.xpose.msra.mxu0 0
        %910 = vmatprep.subr.bf16.mxu0 0
        %911 = vmatpush1.bf16.xpose.msra.mxu0 0
        %912 = vmatprep.subr.bf16.mxu0 0
        %913 = vmatpush1.bf16.xpose.msra.mxu0 0
        %914 = vmatprep.subr.bf16.mxu0 0
        %915 = vmatpush1.bf16.xpose.msra.mxu0 0
        %916 = vmatprep.subr.bf16.mxu0 0
        %917 = vmatpush1.bf16.xpose.msra.mxu0 0
        %918 = vmatprep.subr.bf16.mxu0 0
        %919 = vmatpush1.bf16.xpose.msra.mxu0 0
        %920 = vmatprep.subr.bf16.mxu0 0
        %921 = vmatpush1.bf16.xpose.msra.mxu0 0
        %922 = vmatprep.subr.bf16.mxu0 0
        %923 = vmatpush1.bf16.xpose.msra.mxu0 0
        %924 = vmatprep.subr.bf16.mxu0 0
        %925 = vmatpush1.bf16.xpose.msra.mxu0 0
        %926 = vmatprep.subr.bf16.mxu0 0
        %927 = vmatpush1.bf16.xpose.msra.mxu0 0
        %928 = vmatprep.subr.bf16.mxu0 0
        %929 = vmatpush1.bf16.xpose.msra.mxu0 0
        %930 = vmatprep.mubr.bf16.mxu0 0
        %931 = vmatmul.mubr.bf16.gmra.mrb[0].mxu0 %v893
        %v932 = vpop.f32.mrb[0].mxu0
        %v933 = vadd.f32 0.0, %v932
        %v934 = vpop.f32.mrb[0].mxu0
        %v935 = vpop.f32.mrb[0].mxu0
        %v936 = vpop.f32.mrb[0].mxu0
        %937 = vdwg.mxu0
        %v938 = vmul.f32 %v795, 0.35355338
        %v939 = vmul.f32 %v841, 0.35355338
        %v940 = vmul.f32 %v887, 0.35355338
        %v941 = vmul.f32 %v933, 0.35355338
        %v942 = vadd.f32 %v938, %v538
        %v943 = vadd.f32 %v939, %v538
        %v944 = vadd.f32 %v940, %v538
        %v945 = vadd.f32 %v941, %v538
        %v946 = vsel %vm753, %v942, -inf
        %947 = vmax.xlane.f32.xlu0 %v946
        %v948 = vpop.xlane.xlu0 %947
        %v949 = vsel %vm753, %v943, -inf
        %950 = vmax.xlane.f32.xlu0 %v949
        %v951 = vpop.xlane.xlu0 %950
        %v952 = vsel %vm753, %v944, -inf
        %953 = vmax.xlane.f32.xlu0 %v952
        %v954 = vpop.xlane.xlu0 %953
        %v955 = vsel %vm753, %v945, -inf
        %956 = vmax.xlane.f32.xlu0 %v955
        %v957 = vpop.xlane.xlu0 %956
        %v958 = vsub.f32 %v942, %v948
        %v959 = vsub.f32 %v943, %v951
        %v960 = vsub.f32 %v944, %v954
        %v961 = vsub.f32 %v945, %v957
        %v962 = vmul.f32 %v958, 1.442695
        %v963 = vpow.pop %v962
        %v964 = vmul.f32 %v959, 1.442695
        %v965 = vpow.pop %v964
        %v966 = vmul.f32 %v960, 1.442695
        %v967 = vpow.pop %v966
        %v968 = vmul.f32 %v961, 1.442695
        %v969 = vpow.pop %v968
        %v970 = vsel %vm753, %v963, 0.0
        %971 = vadd.xlane.f32.xlu0 %v970
        %v972 = vpop.xlane.xlu0 %971
        %v973 = vsel %vm753, %v965, 0.0
        %974 = vadd.xlane.f32.xlu0 %v973
        %v975 = vpop.xlane.xlu0 %974
        %v976 = vsel %vm753, %v967, 0.0
        %977 = vadd.xlane.f32.xlu0 %v976
        %v978 = vpop.xlane.xlu0 %977
        %v979 = vsel %vm753, %v969, 0.0
        %980 = vadd.xlane.f32.xlu0 %v979
        %v981 = vpop.xlane.xlu0 %980
        %v982 = vrcp.pop %v972
        %v983 = vrcp.pop %v975
        %v984 = vrcp.pop %v978
        %v985 = vrcp.pop %v981
        %v986 = vmul.f32 %v963, %v982
        %v987 = vmul.f32 %v965, %v983
        %v988 = vmul.f32 %v967, %v984
        %v989 = vmul.f32 %v969, %v985
        %v990 = vpack.c.bf16 %v986, %v986
        %v991 = vpack.c.bf16 %v987, %v987
        %v992 = vpack.c.bf16 %v988, %v988
        %v993 = vpack.c.bf16 %v989, %v989
        %v995 = vsel %vm753, %v990, 0
        %vm997 = vcmask 1043456
        %v999 = vsel %vm997, %v749, 0
        %1001 = vmatprep.subr.bf16.mxu0 0
        %1002 = vmatpush1.bf16.msra.mxu0 %v999
        %1003 = vmatprep.subr.bf16.mxu0 0
        %1004 = vmatpush1.bf16.msra.mxu0 0
        %1005 = vmatprep.subr.bf16.mxu0 0
        %1006 = vmatpush1.bf16.msra.mxu0 0
        %1007 = vmatprep.subr.bf16.mxu0 0
        %1008 = vmatpush1.bf16.msra.mxu0 0
        %1009 = vmatprep.subr.bf16.mxu0 0
        %1010 = vmatpush1.bf16.msra.mxu0 0
        %1011 = vmatprep.subr.bf16.mxu0 0
        %1012 = vmatpush1.bf16.msra.mxu0 0
        %1013 = vmatprep.subr.bf16.mxu0 0
        %1014 = vmatpush1.bf16.msra.mxu0 0
        %1015 = vmatprep.subr.bf16.mxu0 0
        %1016 = vmatpush1.bf16.msra.mxu0 0
        %1017 = vmatprep.subr.bf16.mxu0 0
        %1018 = vmatpush1.bf16.msra.mxu0 0
        %1019 = vmatprep.subr.bf16.mxu0 0
        %1020 = vmatpush1.bf16.msra.mxu0 0
        %1021 = vmatprep.subr.bf16.mxu0 0
        %1022 = vmatpush1.bf16.msra.mxu0 0
        %1023 = vmatprep.subr.bf16.mxu0 0
        %1024 = vmatpush1.bf16.msra.mxu0 0
        %1025 = vmatprep.subr.bf16.mxu0 0
        %1026 = vmatpush1.bf16.msra.mxu0 0
        %1027 = vmatprep.subr.bf16.mxu0 0
        %1028 = vmatpush1.bf16.msra.mxu0 0
        %1029 = vmatprep.subr.bf16.mxu0 0
        %1030 = vmatpush1.bf16.msra.mxu0 0
        %1031 = vmatprep.subr.bf16.mxu0 0
        %1032 = vmatpush1.bf16.msra.mxu0 0
        %1033 = vmatprep.mubr.bf16.mxu0 0
        %1034 = vmatmul.mubr.bf16.gmra.mrb[0].mxu0 %v995
        %v1035 = vpop.f32.mrb[0].mxu0
        %v1036 = vadd.f32 0.0, %v1035
        %v1037 = vpop.f32.mrb[0].mxu0
        %v1038 = vpop.f32.mrb[0].mxu0
        %v1039 = vpop.f32.mrb[0].mxu0
        %1040 = vdwg.mxu0
        %v1042 = vsel %vm753, %v991, 0
        %v1045 = vsel %vm997, %v750, 0
        %1047 = vmatprep.subr.bf16.mxu0 0
        %1048 = vmatpush1.bf16.msra.mxu0 %v1045
        %1049 = vmatprep.subr.bf16.mxu0 0
        %1050 = vmatpush1.bf16.msra.mxu0 0
        %1051 = vmatprep.subr.bf16.mxu0 0
        %1052 = vmatpush1.bf16.msra.mxu0 0
        %1053 = vmatprep.subr.bf16.mxu0 0
        %1054 = vmatpush1.bf16.msra.mxu0 0
        %1055 = vmatprep.subr.bf16.mxu0 0
        %1056 = vmatpush1.bf16.msra.mxu0 0
        %1057 = vmatprep.subr.bf16.mxu0 0
        %1058 = vmatpush1.bf16.msra.mxu0 0
        %1059 = vmatprep.subr.bf16.mxu0 0
        %1060 = vmatpush1.bf16.msra.mxu0 0
        %1061 = vmatprep.subr.bf16.mxu0 0
        %1062 = vmatpush1.bf16.msra.mxu0 0
        %1063 = vmatprep.subr.bf16.mxu0 0
        %1064 = vmatpush1.bf16.msra.mxu0 0
        %1065 = vmatprep.subr.bf16.mxu0 0
        %1066 = vmatpush1.bf16.msra.mxu0 0
        %1067 = vmatprep.subr.bf16.mxu0 0
        %1068 = vmatpush1.bf16.msra.mxu0 0
        %1069 = vmatprep.subr.bf16.mxu0 0
        %1070 = vmatpush1.bf16.msra.mxu0 0
        %1071 = vmatprep.subr.bf16.mxu0 0
        %1072 = vmatpush1.bf16.msra.mxu0 0
        %1073 = vmatprep.subr.bf16.mxu0 0
        %1074 = vmatpush1.bf16.msra.mxu0 0
        %1075 = vmatprep.subr.bf16.mxu0 0
        %1076 = vmatpush1.bf16.msra.mxu0 0
        %1077 = vmatprep.subr.bf16.mxu0 0
        %1078 = vmatpush1.bf16.msra.mxu0 0
        %1079 = vmatprep.mubr.bf16.mxu0 0
        %1080 = vmatmul.mubr.bf16.gmra.mrb[0].mxu0 %v1042
        %v1081 = vpop.f32.mrb[0].mxu0
        %v1082 = vadd.f32 0.0, %v1081
        %v1083 = vpop.f32.mrb[0].mxu0
        %v1084 = vpop.f32.mrb[0].mxu0
        %v1085 = vpop.f32.mrb[0].mxu0
        %1086 = vdwg.mxu0
        %v1088 = vsel %vm753, %v992, 0
        %v1091 = vsel %vm997, %v751, 0
        %1093 = vmatprep.subr.bf16.mxu0 0
        %1094 = vmatpush1.bf16.msra.mxu0 %v1091
        %1095 = vmatprep.subr.bf16.mxu0 0
        %1096 = vmatpush1.bf16.msra.mxu0 0
        %1097 = vmatprep.subr.bf16.mxu0 0
        %1098 = vmatpush1.bf16.msra.mxu0 0
        %1099 = vmatprep.subr.bf16.mxu0 0
        %1100 = vmatpush1.bf16.msra.mxu0 0
        %1101 = vmatprep.subr.bf16.mxu0 0
        %1102 = vmatpush1.bf16.msra.mxu0 0
        %1103 = vmatprep.subr.bf16.mxu0 0
        %1104 = vmatpush1.bf16.msra.mxu0 0
        %1105 = vmatprep.subr.bf16.mxu0 0
        %1106 = vmatpush1.bf16.msra.mxu0 0
        %1107 = vmatprep.subr.bf16.mxu0 0
        %1108 = vmatpush1.bf16.msra.mxu0 0
        %1109 = vmatprep.subr.bf16.mxu0 0
        %1110 = vmatpush1.bf16.msra.mxu0 0
        %1111 = vmatprep.subr.bf16.mxu0 0
        %1112 = vmatpush1.bf16.msra.mxu0 0
        %1113 = vmatprep.subr.bf16.mxu0 0
        %1114 = vmatpush1.bf16.msra.mxu0 0
        %1115 = vmatprep.subr.bf16.mxu0 0
        %1116 = vmatpush1.bf16.msra.mxu0 0
        %1117 = vmatprep.subr.bf16.mxu0 0
        %1118 = vmatpush1.bf16.msra.mxu0 0
        %1119 = vmatprep.subr.bf16.mxu0 0
        %1120 = vmatpush1.bf16.msra.mxu0 0
        %1121 = vmatprep.subr.bf16.mxu0 0
        %1122 = vmatpush1.bf16.msra.mxu0 0
        %1123 = vmatprep.subr.bf16.mxu0 0
        %1124 = vmatpush1.bf16.msra.mxu0 0
        %1125 = vmatprep.mubr.bf16.mxu0 0
        %1126 = vmatmul.mubr.bf16.gmra.mrb[0].mxu0 %v1088
        %v1127 = vpop.f32.mrb[0].mxu0
        %v1128 = vadd.f32 0.0, %v1127
        %v1129 = vpop.f32.mrb[0].mxu0
        %v1130 = vpop.f32.mrb[0].mxu0
        %v1131 = vpop.f32.mrb[0].mxu0
        %1132 = vdwg.mxu0
        %v1134 = vsel %vm753, %v993, 0
        %v1137 = vsel %vm997, %v752, 0
        %1139 = vmatprep.subr.bf16.mxu0 0
        %1140 = vmatpush1.bf16.msra.mxu0 %v1137
        %1141 = vmatprep.subr.bf16.mxu0 0
        %1142 = vmatpush1.bf16.msra.mxu0 0
        %1143 = vmatprep.subr.bf16.mxu0 0
        %1144 = vmatpush1.bf16.msra.mxu0 0
        %1145 = vmatprep.subr.bf16.mxu0 0
        %1146 = vmatpush1.bf16.msra.mxu0 0
        %1147 = vmatprep.subr.bf16.mxu0 0
        %1148 = vmatpush1.bf16.msra.mxu0 0
        %1149 = vmatprep.subr.bf16.mxu0 0
        %1150 = vmatpush1.bf16.msra.mxu0 0
        %1151 = vmatprep.subr.bf16.mxu0 0
        %1152 = vmatpush1.bf16.msra.mxu0 0
        %1153 = vmatprep.subr.bf16.mxu0 0
        %1154 = vmatpush1.bf16.msra.mxu0 0
        %1155 = vmatprep.subr.bf16.mxu0 0
        %1156 = vmatpush1.bf16.msra.mxu0 0
        %1157 = vmatprep.subr.bf16.mxu0 0
        %1158 = vmatpush1.bf16.msra.mxu0 0
        %1159 = vmatprep.subr.bf16.mxu0 0
        %1160 = vmatpush1.bf16.msra.mxu0 0
        %1161 = vmatprep.subr.bf16.mxu0 0
        %1162 = vmatpush1.bf16.msra.mxu0 0
        %1163 = vmatprep.subr.bf16.mxu0 0
        %1164 = vmatpush1.bf16.msra.mxu0 0
        %1165 = vmatprep.subr.bf16.mxu0 0
        %1166 = vmatpush1.bf16.msra.mxu0 0
        %1167 = vmatprep.subr.bf16.mxu0 0
        %1168 = vmatpush1.bf16.msra.mxu0 0
        %1169 = vmatprep.subr.bf16.mxu0 0
        %1170 = vmatpush1.bf16.msra.mxu0 0
        %1171 = vmatprep.mubr.bf16.mxu0 0
        %1172 = vmatmul.mubr.bf16.gmra.mrb[0].mxu0 %v1134
        %v1173 = vpop.f32.mrb[0].mxu0
        %v1174 = vadd.f32 0.0, %v1173
        %v1175 = vpop.f32.mrb[0].mxu0
        %v1176 = vpop.f32.mrb[0].mxu0
        %v1177 = vpop.f32.mrb[0].mxu0
        %1178 = vdwg.mxu0
        %1180 = vrot.lane.b32.xlu0 %v1082, 8
        %v1181 = vpop.permute.xlu0 %1180
        %1184 = vrot.lane.b32.xlu0 %v1128, 16
        %v1185 = vpop.permute.xlu0 %1184
        %1188 = vrot.lane.b32.xlu0 %v1174, 24
        %v1189 = vpop.permute.xlu0 %1188
        %v1191 = vsel %vm753, %v1036, %v1181
        %vm1192 = vcmask 130048
        %v1193 = vsel %vm1192, %v1191, %v1185
        %vm1194 = vcmask 195584
        %v1195 = vsel %vm1194, %v1193, %v1189
        %v1196 = vpack.c.bf16 %v1195, %v1195
        %v1197 = vld [vmem:[#allocation5] sm:$0xf]
        %v1198 = vld [vmem:[#allocation5 + $0x4] sm:$0xf]
        %v1199 = vld [vmem:[#allocation5 + $0x8] sm:$0xf]
        %v1200 = vld [vmem:[#allocation5 + $0xc] sm:$0xf]
        %v1201 = vld [vmem:[%s10] sm:$0x1]
        %v1202 = vld [vmem:[%s11] sm:$0x1]
        %v1207 = vunpack.c.l.b16 %v1197
        %v1208 = vunpack.c.l.b16 %v1198
        %v1209 = vunpack.c.l.b16 %v1199
        %v1210 = vunpack.c.l.b16 %v1200
        %v1211 = vpack.c.b16 %v1208, %v1207
        %v1212 = vpack.c.b16 %v1210, %v1209
        %v1216 = vsel %vm555, %v1196, 0
        %1218 = vmatprep.subr.bf16.mxu0 0
        %1219 = vmatpush1.bf16.msra.mxu0 %v1211
        %1220 = vmatprep.subr.bf16.mxu0 0
        %1221 = vmatpush1.bf16.msra.mxu0 %v1212
        %1222 = vmatprep.subr.bf16.mxu0 0
        %1223 = vmatpush1.bf16.msra.mxu0 0
        %1224 = vmatprep.subr.bf16.mxu0 0
        %1225 = vmatpush1.bf16.msra.mxu0 0
        %1226 = vmatprep.subr.bf16.mxu0 0
        %1227 = vmatpush1.bf16.msra.mxu0 0
        %1228 = vmatprep.subr.bf16.mxu0 0
        %1229 = vmatpush1.bf16.msra.mxu0 0
        %1230 = vmatprep.subr.bf16.mxu0 0
        %1231 = vmatpush1.bf16.msra.mxu0 0
        %1232 = vmatprep.subr.bf16.mxu0 0
        %1233 = vmatpush1.bf16.msra.mxu0 0
        %1234 = vmatprep.subr.bf16.mxu0 0
        %1235 = vmatpush1.bf16.msra.mxu0 0
        %1236 = vmatprep.subr.bf16.mxu0 0
        %1237 = vmatpush1.bf16.msra.mxu0 0
        %1238 = vmatprep.subr.bf16.mxu0 0
        %1239 = vmatpush1.bf16.msra.mxu0 0
        %1240 = vmatprep.subr.bf16.mxu0 0
        %1241 = vmatpush1.bf16.msra.mxu0 0
        %1242 = vmatprep.subr.bf16.mxu0 0
        %1243 = vmatpush1.bf16.msra.mxu0 0
        %1244 = vmatprep.subr.bf16.mxu0 0
        %1245 = vmatpush1.bf16.msra.mxu0 0
        %1246 = vmatprep.subr.bf16.mxu0 0
        %1247 = vmatpush1.bf16.msra.mxu0 0
        %1248 = vmatprep.subr.bf16.mxu0 0
        %1249 = vmatpush1.bf16.msra.mxu0 0
        %1250 = vmatprep.mubr.bf16.mxu0 0
        %1251 = vmatmul.mubr.bf16.gmra.mrb[0].mxu0 %v1216
        %v1252 = vpop.f32.mrb[0].mxu0
        %v1253 = vadd.f32 %v522, %v1252
        %v1254 = vpop.f32.mrb[0].mxu0
        %v1255 = vpop.f32.mrb[0].mxu0
        %v1256 = vpop.f32.mrb[0].mxu0
        %1257 = vdwg.mxu0
        %v1258 = vsel %vm555, %v1253, 0.0
        %1259 = vadd.xlane.f32.xlu0 %v1258
        %v1260 = vpop.xlane.xlu0 %1259
        %v1261 = vrcp.pop 32.0
        %v1262 = vmul.f32 %v1260, %v1261
        %v1263 = vsub.f32 %v1253, %v1262
        %v1264 = vmul.f32 %v1263, %v1263
        %v1265 = vsel %vm555, %v1264, 0.0
        %1266 = vadd.xlane.f32.xlu0 %v1265
        %v1267 = vpop.xlane.xlu0 %1266
        %v1268 = vmul.f32 %v1267, %v1261
        %v1269 = vadd.f32 %v1268, 1e-05
        %v1270 = vrsqrt.pop %v1269
        %v1271 = vmul.f32 %v1263, %v1270
        %v1273 = vlaneseq
        %v1274 = vshrl.u32 %v1273, 7
        %v1275 = vsub.s32 0, %v1274
        %v1276 = vrot.slane %v1201, %v1275
        %v1278 = vmul.f32 %v1271, %v1276
        %v1280 = vlaneseq
        %v1281 = vshrl.u32 %v1280, 7
        %v1282 = vsub.s32 0, %v1281
        %v1283 = vrot.slane %v1202, %v1282
        %v1285 = vadd.f32 %v1278, %v1283
        %v1286 = vpack.c.bf16 %v1285, %v1285
        %v1287 = vld [vmem:[#allocation7] sm:$0xf]
        %v1288 = vld [vmem:[#allocation7 + $0x4] sm:$0xf]
        %v1289 = vld [vmem:[#allocation7 + $0x8] sm:$0xf]
        %v1290 = vld [vmem:[#allocation7 + $0xc] sm:$0xf]
        %v1291 = vld [vmem:[%s7] sm:$0x1]
        %v1293 = vlaneseq
        %v1294 = vshrl.u32 %v1293, 7
        %v1295 = vsub.s32 0, %v1294
        %v1296 = vrot.slane %v1291, %v1295
        %v1302 = vunpack.c.l.b16 %v1287
        %v1303 = vunpack.c.l.b16 %v1288
        %v1304 = vunpack.c.l.b16 %v1289
        %v1305 = vunpack.c.l.b16 %v1290
        %v1306 = vpack.c.b16 %v1303, %v1302
        %v1307 = vpack.c.b16 %v1305, %v1304
        %v1311 = vsel %vm555, %v1286, 0
        %1313 = vmatprep.subr.bf16.mxu0 0
        %1314 = vmatpush1.bf16.msra.mxu0 %v1306
        %1315 = vmatprep.subr.bf16.mxu0 0
        %1316 = vmatpush1.bf16.msra.mxu0 %v1307
        %1317 = vmatprep.subr.bf16.mxu0 0
        %1318 = vmatpush1.bf16.msra.mxu0 0
        %1319 = vmatprep.subr.bf16.mxu0 0
        %1320 = vmatpush1.bf16.msra.mxu0 0
        %1321 = vmatprep.subr.bf16.mxu0 0
        %1322 = vmatpush1.bf16.msra.mxu0 0
        %1323 = vmatprep.subr.bf16.mxu0 0
        %1324 = vmatpush1.bf16.msra.mxu0 0
        %1325 = vmatprep.subr.bf16.mxu0 0
        %1326 = vmatpush1.bf16.msra.mxu0 0
        %1327 = vmatprep.subr.bf16.mxu0 0
        %1328 = vmatpush1.bf16.msra.mxu0 0
        %1329 = vmatprep.subr.bf16.mxu0 0
        %1330 = vmatpush1.bf16.msra.mxu0 0
        %1331 = vmatprep.subr.bf16.mxu0 0
        %1332 = vmatpush1.bf16.msra.mxu0 0
        %1333 = vmatprep.subr.bf16.mxu0 0
        %1334 = vmatpush1.bf16.msra.mxu0 0
        %1335 = vmatprep.subr.bf16.mxu0 0
        %1336 = vmatpush1.bf16.msra.mxu0 0
        %1337 = vmatprep.subr.bf16.mxu0 0
        %1338 = vmatpush1.bf16.msra.mxu0 0
        %1339 = vmatprep.subr.bf16.mxu0 0
        %1340 = vmatpush1.bf16.msra.mxu0 0
        %1341 = vmatprep.subr.bf16.mxu0 0
        %1342 = vmatpush1.bf16.msra.mxu0 0
        %1343 = vmatprep.subr.bf16.mxu0 0
        %1344 = vmatpush1.bf16.msra.mxu0 0
        %1345 = vmatprep.mubr.bf16.mxu0 0
        %1346 = vmatmul.mubr.bf16.gmra.mrb[0].mxu0 %v1311
        %v1347 = vpop.f32.mrb[0].mxu0
        %v1348 = vadd.f32 %v1296, %v1347
        %v1349 = vpop.f32.mrb[0].mxu0
        %v1350 = vpop.f32.mrb[0].mxu0
        %v1351 = vpop.f32.mrb[0].mxu0
        %1352 = vdwg.mxu0
        %vm1353 = vcmp.gt.f32.partialorder %v1348, 0.0
        %v1354 = vmul.f32 %v1348, 0.01
        %v1355 = vsel %vm1353, %v1348, %v1354
        %v1356 = vpack.c.bf16 %v1355, %v1355
        %v1357 = vld [vmem:[%s8] sm:$0xf]
        %v1358 = vld [vmem:[%s8 + $0x4] sm:$0xf]
        %v1359 = vld [vmem:[%s8 + $0x8] sm:$0xf]
        %v1360 = vld [vmem:[%s8 + $0xc] sm:$0xf]
        %v1361 = vld [vmem:[%s8 + $0x10] sm:$0xf]
        %v1362 = vld [vmem:[%s8 + $0x14] sm:$0xf]
        %v1363 = vld [vmem:[%s8 + $0x18] sm:$0xf]
        %v1364 = vld [vmem:[%s8 + $0x1c] sm:$0xf]
        %v1365 = vld [vmem:[%s9] sm:$0x1]
        %v1367 = vlaneseq
        %v1368 = vshrl.u32 %v1367, 7
        %v1369 = vsub.s32 0, %v1368
        %v1370 = vrot.slane %v1365, %v1369
        %v1380 = vunpack.c.l.b16 %v1357
        %v1381 = vunpack.c.l.b16 %v1358
        %v1382 = vunpack.c.l.b16 %v1359
        %v1383 = vunpack.c.l.b16 %v1360
        %v1384 = vunpack.c.l.b16 %v1361
        %v1385 = vunpack.c.l.b16 %v1362
        %v1386 = vunpack.c.l.b16 %v1363
        %v1387 = vunpack.c.l.b16 %v1364
        %v1388 = vpack.c.b16 %v1381, %v1380
        %v1389 = vpack.c.b16 %v1383, %v1382
        %v1390 = vpack.c.b16 %v1385, %v1384
        %v1391 = vpack.c.b16 %v1387, %v1386
        %vm1396 = vcmask 523264
        %v1398 = vsel %vm1396, %v1356, 0
        %1400 = vmatprep.subr.bf16.mxu0 0
        %1401 = vmatpush1.bf16.msra.mxu0 %v1388
        %1402 = vmatprep.subr.bf16.mxu0 0
        %1403 = vmatpush1.bf16.msra.mxu0 %v1389
        %1404 = vmatprep.subr.bf16.mxu0 0
        %1405 = vmatpush1.bf16.msra.mxu0 %v1390
        %1406 = vmatprep.subr.bf16.mxu0 0
        %1407 = vmatpush1.bf16.msra.mxu0 %v1391
        %1408 = vmatprep.subr.bf16.mxu0 0
        %1409 = vmatpush1.bf16.msra.mxu0 0
        %1410 = vmatprep.subr.bf16.mxu0 0
        %1411 = vmatpush1.bf16.msra.mxu0 0
        %1412 = vmatprep.subr.bf16.mxu0 0
        %1413 = vmatpush1.bf16.msra.mxu0 0
        %1414 = vmatprep.subr.bf16.mxu0 0
        %1415 = vmatpush1.bf16.msra.mxu0 0
        %1416 = vmatprep.subr.bf16.mxu0 0
        %1417 = vmatpush1.bf16.msra.mxu0 0
        %1418 = vmatprep.subr.bf16.mxu0 0
        %1419 = vmatpush1.bf16.msra.mxu0 0
        %1420 = vmatprep.subr.bf16.mxu0 0
        %1421 = vmatpush1.bf16.msra.mxu0 0
        %1422 = vmatprep.subr.bf16.mxu0 0
        %1423 = vmatpush1.bf16.msra.mxu0 0
        %1424 = vmatprep.subr.bf16.mxu0 0
        %1425 = vmatpush1.bf16.msra.mxu0 0
        %1426 = vmatprep.subr.bf16.mxu0 0
        %1427 = vmatpush1.bf16.msra.mxu0 0
        %1428 = vmatprep.subr.bf16.mxu0 0
        %1429 = vmatpush1.bf16.msra.mxu0 0
        %1430 = vmatprep.subr.bf16.mxu0 0
        %1431 = vmatpush1.bf16.msra.mxu0 0
        %1432 = vmatprep.mubr.bf16.mxu0 0
        %1433 = vmatmul.mubr.bf16.gmra.mrb[0].mxu0 %v1398
        %v1434 = vpop.f32.mrb[0].mxu0
        %v1435 = vadd.f32 %v1370, %v1434
        %v1436 = vpop.f32.mrb[0].mxu0
        %v1437 = vpop.f32.mrb[0].mxu0
        %v1438 = vpop.f32.mrb[0].mxu0
        %1439 = vdwg.mxu0
        %v1440 = vld [vmem:[%s12] sm:$0x1]
        %v1441 = vld [vmem:[%s13] sm:$0x1]
        %v1442 = vadd.f32 %v1435, %v1285
        %v1443 = vsel %vm555, %v1442, 0.0
        %1444 = vadd.xlane.f32.xlu0 %v1443
        %v1445 = vpop.xlane.xlu0 %1444
        %v1446 = vmul.f32 %v1445, %v1261
        %v1447 = vsub.f32 %v1442, %v1446
        %v1448 = vmul.f32 %v1447, %v1447
        %v1449 = vsel %vm555, %v1448, 0.0
        %1450 = vadd.xlane.f32.xlu0 %v1449
        %v1451 = vpop.xlane.xlu0 %1450
        %v1452 = vmul.f32 %v1451, %v1261
        %v1453 = vadd.f32 %v1452, 1e-05
        %v1454 = vrsqrt.pop %v1453
        %v1455 = vmul.f32 %v1447, %v1454
        %v1457 = vlaneseq
        %v1458 = vshrl.u32 %v1457, 7
        %v1459 = vsub.s32 0, %v1458
        %v1460 = vrot.slane %v1440, %v1459
        %v1462 = vmul.f32 %v1455, %v1460
        %v1464 = vlaneseq
        %v1465 = vshrl.u32 %v1464, 7
        %v1466 = vsub.s32 0, %v1465
        %v1467 = vrot.slane %v1441, %v1466
        %v1469 = vadd.f32 %v1462, %v1467
        %1470 = vst.msk [vmem:[%s513] sm:$0xff] %vm555, %v1469
        %s1471 = sand.u32 %s342, 1
        %s1472 = scalar_lea.sflag [#allocation4], %s1471
        %s1473 = sand.u32 %s342, 1
        %s1474 = smul.addr %s1473, 8
        %s1475 = scalar_lea.vmem [#allocation8], %s1474
        // Predicated region
        $region89: #{tpu_custom_call.1} parent=75 // pred_check
          %p1476 = pneg %p352
        $region90: #{tpu_custom_call.1} parent=75 // pred_check_branch
          %1478 = sbr.rel (%p1476) target = $region92
        $region91: #{tpu_custom_call.1} parent=75 // pred_region
          %s1480 = ssub.s32 128, 128
          %1481 = vsyncadd %s1472, %s1480
          %s1482 = smul.addr %s30, 128
          %s1483 = scalar_lea.hbm %s14, %s1482
          %s1485 = sshll.u32 %s1475, 4
          %s1486 = int_to_ptr.vmem [resolvable:$true] %s1485
          %1488 = dma.vmem_to_hbm [thread:$0]  %s1486, 128, %s1483, %s1472
        $region92: #{tpu_custom_call.1} parent=75 // pred_fallthru
          _
      $region76: #{tpu_custom_call.1} parent=5 // pred_fallthru
        _
      %p1489 = scmp.le.s32.totalorder 2, %s25
      // Predicated region
      $region93: #{tpu_custom_call.1} parent=5 // pred_check
        %p1490 = pneg %p1489
      $region94: #{tpu_custom_call.1} parent=5 // pred_check_branch
        %1492 = sbr.rel (%p1490) target = $region96
      $region95: #{tpu_custom_call.1} parent=5 // pred_region
        %s1493 = ssub.s32 %s25, 2
        // Predicated region
        $region97: #{tpu_custom_call.1} parent=95 // pred_check
          %p1494 = pneg %p358
        $region98: #{tpu_custom_call.1} parent=95 // pred_check_branch
          %1496 = sbr.rel (%p1494) target = $region100
        $region99: #{tpu_custom_call.1} parent=95 // pred_region
          %s1497 = sand.u32 %s343, 1
          %s1498 = scalar_lea.sflag [#allocation4], %s1497
          %s1499 = sand.u32 %s343, 1
          %s1500 = smul.addr %s1499, 8
          %s1501 = scalar_lea.vmem [#allocation8], %s1500
          %1502 = dma.done %s1498, 128
        $region100: #{tpu_custom_call.1} parent=95 // pred_fallthru
          _
      $region96: #{tpu_custom_call.1} parent=5 // pred_fallthru
        _
    $region6: #{tpu_custom_call.1} parent=1 // loop_footer
      %s29 = sadd.s32 1, %s25
    $region7: #{tpu_custom_call.1} parent=1 // loop_footer_branch
      %24 = sbr.rel target = $region3
    $region8: #{tpu_custom_call.1} parent=1 // loop_exit
      _
    %1503 = vsyncpa [#allocation3], 1
    %s1504 = scalar_lea.sflag [#allocation3], 1
    %1505 = vsyncpa %s1504, 1
    %1506 = vsyncpa [#allocation6], 1
    %1507 = vsyncpa [#allocation4], 1
    %s1508 = scalar_lea.sflag [#allocation4], 1
    %1509 = vsyncpa %s1508, 1

</llo_original>
